<compile_context>
chip_gen: v6e
topology: v6e:2x2x1
jax: 0.10.0
libtpu: 0.0.40
codegen_flags: <defaults>
</compile_context>

<pallas_src>
import functools
import math

import jax
import jax.numpy as jnp
from jax.experimental import pallas as pl
from jax.experimental.pallas import tpu as pltpu

_MIB = 1024 * 1024
_LANE = 128
_FUSE_MAX_ROWS = 512      # fused single-matmul attention when TB*S <= this


# --------------------------------------------------------------------------- #
# Small helpers
# --------------------------------------------------------------------------- #
def _round_up(x, m):
    return (x + m - 1) // m * m


def _pad_to(a, shape):
    return jnp.pad(a, [(0, t - s) for s, t in zip(a.shape, shape)])


def _tpu_vmem_capacity_bytes():
    try:
        return int(getattr(pltpu.get_tpu_info(), "vmem_capacity_bytes"))
    except Exception:  # noqa: BLE001 - hardware query only; assume smallest (v7x)
        return 64 * _MIB


@functools.lru_cache(maxsize=1)
def _pipeline_mode_supported():
    """Explicit feature probe for BlockSpec(pipeline_mode=pl.Buffered(1))."""
    if not hasattr(pl, "Buffered"):
        return False
    try:
        spec = pl.BlockSpec((8, 128), lambda i: (0, 0),
                            pipeline_mode=pl.Buffered(1))

        def _probe_kernel(x_ref, o_ref):
            o_ref[...] = x_ref[...] + 1.0

        probe = pl.pallas_call(
            _probe_kernel,
            out_shape=jax.ShapeDtypeStruct((8, 128), jnp.float32),
            grid_spec=pltpu.PrefetchScalarGridSpec(
                num_scalar_prefetch=0, grid=(1,),
                in_specs=[spec],
                out_specs=pl.BlockSpec((8, 128), lambda i: (0, 0))),
        )
        jax.jit(probe).lower(jnp.zeros((8, 128), jnp.float32))
        return True
    except Exception:  # noqa: BLE001 - probe failure only disables the feature
        return False


# --------------------------------------------------------------------------- #
# Kernel
# --------------------------------------------------------------------------- #
def _make_kernel(*, TB, S, D, Dp, DFFp, OUTP, ff_chunk, kv_chunk, fuse_attn):
    R = TB * S
    inv_d = 1.0 / float(D)
    pad_cols = float(Dp - D)
    scale = 1.0 / math.sqrt(float(D))
    inv_sqrt2 = 1.0 / math.sqrt(2.0)

    def layernorm(v, gamma, beta):
        # Padded feature columns of v are zero by construction, so sums over
        # the padded width Dp can be corrected exactly to the real width D.
        mu = jnp.sum(v, axis=-1, keepdims=True) * inv_d
        c = v - mu
        var = (jnp.sum(c * c, axis=-1, keepdims=True) - pad_cols * mu * mu) * inv_d
        var = jnp.maximum(var, 0.0)
        return c * jax.lax.rsqrt(var + 1e-5) * gamma + beta

    def kernel(x_ref, bias_ref, wqkv_ref, bqkv_ref, wo_ref, pk_ref,
               w1_ref, b1_ref, w2_ref, wl_ref, bl_ref, out_ref):
        # pk rows: 0 ln1_g, 1 ln1_b, 2 ln2_g, 3 ln2_b, 4 lnf_g, 5 lnf_b,
        #          6 attn-out bias, 7 ffn-out bias.
        pk = pk_ref[...]                              # (8, Dp)
        x = x_ref[...].astype(jnp.float32)            # (R, Dp) row-flat slab

        # ---------- self-attention (pre-LN, single head, fused QKV) -------
        h16 = layernorm(x, pk[0:1], pk[1:2]).astype(jnp.bfloat16)
        qkv = jnp.dot(h16, wqkv_ref[...],
                      preferred_element_type=jnp.float32) + bqkv_ref[...]
        q = (qkv[:, :Dp] * scale).astype(jnp.bfloat16)     # 1/sqrt(D) folded in
        k = qkv[:, Dp:2 * Dp].astype(jnp.bfloat16)
        v = qkv[:, 2 * Dp:3 * Dp].astype(jnp.bfloat16)

        if fuse_attn:
            # One lane-dense (R, R) score matmul; bias already carries the
            # block-diagonal batch mask (-1e9 across batches).
            s = jnp.einsum("rd,kd->rk", q, k,
                           preferred_element_type=jnp.float32) + bias_ref[...]
            s = s - jnp.max(s, axis=-1, keepdims=True)
            p = jnp.exp(s)
            p = p * pl.reciprocal(jnp.sum(p, axis=-1, keepdims=True),
                                  approx=True)
            attn = jnp.dot(p.astype(jnp.bfloat16), v,
                           preferred_element_type=jnp.float32)     # (R, Dp)
        else:
            # kv-chunked online softmax: scores/probs stay (TB, S, kv_chunk);
            # the full (TB, S, S) buffer is never materialized.
            q3 = q.reshape(TB, S, Dp)
            k3 = k.reshape(TB, S, Dp)
            v3 = v.reshape(TB, S, Dp)
            m = jnp.full((TB, S, 1), -jnp.inf, jnp.float32)
            lsum = jnp.zeros((TB, S, 1), jnp.float32)
            acc = jnp.zeros((TB, S, Dp), jnp.float32)
            for c0 in range(0, S, kv_chunk):
                c1 = min(c0 + kv_chunk, S)
                s = jnp.einsum("bqd,bkd->bqk", q3, k3[:, c0:c1],
                               preferred_element_type=jnp.float32)
                s = s + bias_ref[:, c0:c1][None, :, :]
                m_new = jnp.maximum(m, jnp.max(s, axis=-1, keepdims=True))
                alpha = jnp.exp(m - m_new)
                p = jnp.exp(s - m_new)
                lsum = alpha * lsum + jnp.sum(p, axis=-1, keepdims=True)
                acc = alpha * acc + jnp.einsum(
                    "bqk,bkd->bqd", p.astype(jnp.bfloat16), v3[:, c0:c1],
                    preferred_element_type=jnp.float32)
                m = m_new
            attn = (acc * pl.reciprocal(lsum, approx=True)).reshape(R, Dp)

        attn = jnp.dot(attn.astype(jnp.bfloat16), wo_ref[...],
                       preferred_element_type=jnp.float32) + pk[6:7]
        x = x + attn

        # ---------- feed-forward (pre-LN, exact GELU), DFF-chunked --------
        h16 = layernorm(x, pk[2:3], pk[3:4]).astype(jnp.bfloat16)
        ff = jnp.zeros((R, Dp), jnp.float32)
        for c0 in range(0, DFFp, ff_chunk):
            c1 = min(c0 + ff_chunk, DFFp)
            hc = jnp.dot(h16, w1_ref[:, c0:c1],
                         preferred_element_type=jnp.float32) + b1_ref[:, c0:c1]
            hc = 0.5 * hc * (1.0 + jax.lax.erf(hc * inv_sqrt2))
            ff = ff + jnp.dot(hc.astype(jnp.bfloat16), w2_ref[c0:c1, :],
                              preferred_element_type=jnp.float32)
        x = x + ff + pk[7:8]

        # ---------- final LayerNorm + lane-dense (padded) output linear ---
        h16 = layernorm(x, pk[4:5], pk[5:6]).astype(jnp.bfloat16)
        out = jnp.dot(h16, wl_ref[...],
                      preferred_element_type=jnp.float32) + bl_ref[...]
        out_ref[...] = out.astype(out_ref.dtype)

    return kernel


# --------------------------------------------------------------------------- #
# Tiling / VMEM policy
# --------------------------------------------------------------------------- #
def _estimate_vmem_bytes(rows, S, Dp, DFFp, OUTP, w_bytes, fuse_attn,
                         ff_chunk, kv_chunk):
    io = 2 * rows * (Dp + OUTP) * 4                 # double-buffered x / out
    act = rows * (10 * Dp + 3 * min(DFFp, ff_chunk) + OUTP) * 4
    if fuse_attn:
        attn = 3 * rows * rows * 4                  # scores + probs + bias
    else:
        attn = 2 * rows * min(S, kv_chunk) * 4 + S * S * 4
    return io + w_bytes + act + attn


def _pick_tile(B, S, Dp, DFFp, OUTP, w_bytes, ff_chunk, kv_chunk, budget):
    divisors = [d for d in range(1, B + 1) if B % d == 0]
    # (8,128) sublane rule: row block must be a multiple of 8 or the full array.
    divisors = [d for d in divisors if (d * S) % 8 == 0 or d == B]

    def est(d):
        rows = d * S
        fuse = rows <= _FUSE_MAX_ROWS
        return _estimate_vmem_bytes(rows, S, Dp, DFFp, OUTP, w_bytes, fuse,
                                    ff_chunk, kv_chunk)

    fits = [d for d in divisors if est(d) <= budget] or [min(divisors)]
    # Keep >= 2 grid steps when possible so both v7x TensorCores get work.
    pref = [d for d in fits if B // d >= 2]
    tb = max(pref) if pref else max(fits)
    return tb, (tb * S) <= _FUSE_MAX_ROWS, est(tb)


def _build_call(kernel, n_blocks, rows, Dp, OUTP, consts, out_dtype,
                vmem_limit, single_buffer):
    def const_spec(arr):
        nd = arr.ndim
        idx = lambda i, _nd=nd: (0,) * _nd
        if single_buffer:
            # Constant across the grid -> single VMEM buffer, no re-DMA.
            return pl.BlockSpec(arr.shape, idx, pipeline_mode=pl.Buffered(1))
        return pl.BlockSpec(arr.shape, idx)

    in_specs = [pl.BlockSpec((rows, Dp), lambda i: (i, 0))]
    in_specs += [const_spec(a) for a in consts]
    out_specs = pl.BlockSpec((rows, OUTP), lambda i: (i, 0))

    cp = dict(dimension_semantics=("parallel",))
    if vmem_limit is not None:
        cp["vmem_limit_bytes"] = int(vmem_limit)

    return pl.pallas_call(
        kernel,
        out_shape=jax.ShapeDtypeStruct((n_blocks * rows, OUTP), out_dtype),
        grid_spec=pltpu.PrefetchScalarGridSpec(
            num_scalar_prefetch=0,
            grid=(n_blocks,),
            in_specs=in_specs,
            out_specs=out_specs),
        compiler_params=pltpu.CompilerParams(**cp),
    )


# --------------------------------------------------------------------------- #
# Wrapper
# --------------------------------------------------------------------------- #
def transformer_embedder(x, params):
    """x: (B, S, D) float32  ->  (B, S, OUT) float32."""
    B, S, D = x.shape
    OUT = params["lin_w"].shape[1]
    DFF = params["ff_w1"].shape[1]
    Dp = _round_up(D, _LANE)
    DFFp = _round_up(DFF, _LANE)
    OUTP = _round_up(OUT, _LANE)
    ff_chunk = min(DFFp, 1024)
    kv_chunk = min(S, 1024)

    f32 = jnp.float32
    g = lambda n: params[n].astype(f32)

    # Fused, lane-padded QKV projection; bf16 weights (f32 MXU accumulation).
    wqkv = jnp.concatenate(
        [_pad_to(g(n), (Dp, Dp)) for n in ("wq", "wk", "wv")],
        axis=1).astype(jnp.bfloat16)                            # (Dp, 3*Dp)
    bqkv = jnp.concatenate(
        [_pad_to(g(n), (1, Dp)) for n in ("bq", "bk", "bv")], axis=1)
    wo = _pad_to(g("wo"), (Dp, Dp)).astype(jnp.bfloat16)
    w1 = _pad_to(g("ff_w1"), (Dp, DFFp)).astype(jnp.bfloat16)
    b1 = _pad_to(g("ff_b1"), (1, DFFp))
    w2 = _pad_to(g("ff_w2"), (DFFp, Dp)).astype(jnp.bfloat16)
    wl = _pad_to(g("lin_w"), (Dp, OUTP)).astype(jnp.bfloat16)
    bl = _pad_to(g("lin_b"), (1, OUTP))
    # Pack all width-D row params into one (8, Dp) slab (one DMA instead of 8).
    pk = jnp.concatenate(
        [_pad_to(g(n), (1, Dp)) for n in
         ("ln1_g", "ln1_b", "ln2_g", "ln2_b", "lnf_g", "lnf_b", "bo", "ff_b2")],
        axis=0)

    single_buffer = _pipeline_mode_supported()
    base_consts = [wqkv, bqkv, wo, pk, w1, b1, w2, wl, bl]
    w_bytes = sum(int(a.size) * a.dtype.itemsize for a in base_consts)
    if not single_buffer:
        w_bytes *= 2

    # Generation-aware VMEM policy (v7x: 64 MiB per TC; v5e/v6e: 128 MiB).
    vmem_cap = _tpu_vmem_capacity_bytes()
    ceiling = 48 * _MIB if vmem_cap <= 64 * _MIB else 100 * _MIB
    budget = int(ceiling * 0.85)

    TB, fuse_attn, est = _pick_tile(B, S, Dp, DFFp, OUTP, w_bytes,
                                    ff_chunk, kv_chunk, budget)
    rows = TB * S
    # TODO(synk): add a query-chunked (sequence-tiled) grid for the case where
    # even TB=1 overflows the VMEM budget (extremely long S).

    # Attention bias: (S, S) rel-pos bias; for the fused small-S path it is
    # tiled block-diagonally over TB batches with a -1e9 cross-batch mask.
    sbias = g("attn_bias")
    if fuse_attn:
        eye = jnp.eye(TB, dtype=f32)
        bias = (jnp.kron(eye, sbias)
                - 1e9 * jnp.kron(1.0 - eye, jnp.ones((S, S), f32)))
    else:
        bias = sbias
    consts = [bias] + base_consts

    # Scoped-VMEM override: trigger above the smallest generation default
    # (16 MiB on v5e); cap is generation-aware (48 MiB v7x, 100 MiB otherwise).
    vmem_limit = None
    if est > 16 * _MIB:
        vmem_limit = int(min(max(est * 3 // 2, 32 * _MIB), ceiling))

    kernel = _make_kernel(TB=TB, S=S, D=D, Dp=Dp, DFFp=DFFp, OUTP=OUTP,
                          ff_chunk=ff_chunk, kv_chunk=kv_chunk,
                          fuse_attn=fuse_attn)
    xp = _pad_to(x.astype(f32), (B, S, Dp)).reshape(B * S, Dp)
    fn = _build_call(kernel, B // TB, rows, Dp, OUTP, consts, x.dtype,
                     vmem_limit, single_buffer)
    out = fn(xp, *consts)
    return out.reshape(B, S, OUTP)[..., :OUT]


# --------------------------------------------------------------------------- #
# Synthetic parameters
# --------------------------------------------------------------------------- #
def init_params(key, d_embed, d_ff, out_features, seq_len, max_seq_len):
    """Deterministic synthetic parameter init (shapes from the module __init__)."""
    ks = iter(jax.random.split(key, 16))
    std = 0.02

    def lin(k, n_in, n_out):
        k1, k2 = jax.random.split(k)
        w = jax.random.normal(k1, (n_in, n_out), jnp.float32) * std
        b = jax.random.normal(k2, (1, n_out), jnp.float32) * std
        return w, b

    p = {}
    p["wq"], p["bq"] = lin(next(ks), d_embed, d_embed)
    p["wk"], p["bk"] = lin(next(ks), d_embed, d_embed)
    p["wv"], p["bv"] = lin(next(ks), d_embed, d_embed)
    p["wo"], p["bo"] = lin(next(ks), d_embed, d_embed)
    p["ff_w1"], p["ff_b1"] = lin(next(ks), d_embed, d_ff)
    p["ff_w2"], p["ff_b2"] = lin(next(ks), d_ff, d_embed)
    p["lin_w"], p["lin_b"] = lin(next(ks), d_embed, out_features)

    ones = jnp.ones((1, d_embed), jnp.float32)
    zeros = jnp.zeros((1, d_embed), jnp.float32)
    p["ln1_g"], p["ln1_b"] = ones, zeros
    p["ln2_g"], p["ln2_b"] = ones, zeros
    p["lnf_g"], p["lnf_b"] = ones, zeros

    # AnomalyBERT-style learnable relative-position bias table,
    # (2*max_seq_len-1, n_head=1), materialized to a dense (S, S) bias in
    # plain-JAX glue before the kernel.
    table = jax.random.normal(next(ks), (2 * max_seq_len - 1, 1), jnp.float32) * std
    rel_idx = (
        jnp.arange(seq_len)[None, :] - jnp.arange(seq_len)[:, None] + max_seq_len - 1
    )
    p["attn_bias"] = table[rel_idx, 0]            # (S, S)
    # TODO(synk): exact get_transformer_encoder defaults (d_ff, rel-pos init) are
    # not in the prompt; a standard pre-LN single-head encoder layer is used here.
    return p


if __name__ == "__main__":
    B, S, D = 2, 8, 32          # (n_batch, n_patch, in_features)
    OUT = 64                    # out_features
    D_FF = 4 * D
    MAX_SEQ = S

    key = jax.random.PRNGKey(0)
    kx, kp = jax.random.split(key)
    x = jax.random.normal(kx, (B, S, D), jnp.float32)
    params = init_params(kp, D, D_FF, OUT, S, MAX_SEQ)

    out = transformer_embedder(x, params)
    out = jax.block_until_ready(out)

    assert out.shape == (B, S, OUT), out.shape
    assert bool(jnp.all(jnp.isfinite(out)))
    print("KERNEL_OK")
</pallas_src>

<mosaic_0001>
module attributes {stable_mosaic.version = 11 : i64} {
  func.func @kernel(%arg0: i32, %arg1: memref<8x128xf32, #tpu.memory_space<vmem>>, %arg2: memref<8x8xf32, #tpu.memory_space<vmem>>, %arg3: memref<128x384xbf16, #tpu.memory_space<vmem>>, %arg4: memref<1x384xf32, #tpu.memory_space<vmem>>, %arg5: memref<128x128xbf16, #tpu.memory_space<vmem>>, %arg6: memref<8x128xf32, #tpu.memory_space<vmem>>, %arg7: memref<128x128xbf16, #tpu.memory_space<vmem>>, %arg8: memref<1x128xf32, #tpu.memory_space<vmem>>, %arg9: memref<128x128xbf16, #tpu.memory_space<vmem>>, %arg10: memref<128x128xbf16, #tpu.memory_space<vmem>>, %arg11: memref<1x128xf32, #tpu.memory_space<vmem>>, %arg12: memref<8x128xf32, #tpu.memory_space<vmem>>) attributes {dimension_semantics = [#tpu.dimension_semantics<parallel>], iteration_bounds = array<i64: 2>, scalar_prefetch = 0 : i64, scratch_operands = 0 : i64, tpu.core_type = #tpu.core_type<tc>, window_params = [{transform_indices = @transform_0, window_bounds = array<i64: 8, 128>}, {pipeline_mode = #tpu.pipeline_mode<synchronous>, transform_indices = @transform_1, window_bounds = array<i64: 8, 8>}, {pipeline_mode = #tpu.pipeline_mode<synchronous>, transform_indices = @transform_2, window_bounds = array<i64: 128, 384>}, {pipeline_mode = #tpu.pipeline_mode<synchronous>, transform_indices = @transform_3, window_bounds = array<i64: 1, 384>}, {pipeline_mode = #tpu.pipeline_mode<synchronous>, transform_indices = @transform_4, window_bounds = array<i64: 128, 128>}, {pipeline_mode = #tpu.pipeline_mode<synchronous>, transform_indices = @transform_5, window_bounds = array<i64: 8, 128>}, {pipeline_mode = #tpu.pipeline_mode<synchronous>, transform_indices = @transform_6, window_bounds = array<i64: 128, 128>}, {pipeline_mode = #tpu.pipeline_mode<synchronous>, transform_indices = @transform_7, window_bounds = array<i64: 1, 128>}, {pipeline_mode = #tpu.pipeline_mode<synchronous>, transform_indices = @transform_8, window_bounds = array<i64: 128, 128>}, {pipeline_mode = #tpu.pipeline_mode<synchronous>, transform_indices = @transform_9, window_bounds = array<i64: 128, 128>}, {pipeline_mode = #tpu.pipeline_mode<synchronous>, transform_indices = @transform_10, window_bounds = array<i64: 1, 128>}, {transform_indices = @transform_11, window_bounds = array<i64: 8, 128>}]} {
    %c0 = arith.constant 0 : index
    %c0_0 = arith.constant 0 : index
    %0 = vector.load %arg6[%c0, %c0_0] : memref<8x128xf32, #tpu.memory_space<vmem>>, vector<8x128xf32>
    %c0_1 = arith.constant 0 : index
    %c0_2 = arith.constant 0 : index
    %1 = vector.load %arg1[%c0_1, %c0_2] : memref<8x128xf32, #tpu.memory_space<vmem>>, vector<8x128xf32>
    %2 = vector.extract_strided_slice %0 {offsets = [0, 0], sizes = [1, 128], strides = [1, 1]} : vector<8x128xf32> to vector<1x128xf32>
    %3 = vector.extract_strided_slice %0 {offsets = [1, 0], sizes = [1, 128], strides = [1, 1]} : vector<8x128xf32> to vector<1x128xf32>
    %cst = arith.constant dense<0.000000e+00> : vector<8xf32>
    %4 = vector.multi_reduction <add>, %1, %cst [1] : vector<8x128xf32> to vector<8xf32>
    %5 = vector.shape_cast %4 : vector<8xf32> to vector<8x1xf32>
    %cst_3 = arith.constant 3.125000e-02 : f32
    %6 = vector.broadcast %cst_3 : f32 to vector<8x1xf32>
    %7 = arith.mulf %5, %6 : vector<8x1xf32>
    %8 = vector.broadcast %7 : vector<8x1xf32> to vector<8x128xf32>
    %9 = arith.subf %1, %8 : vector<8x128xf32>
    %10 = arith.mulf %9, %9 : vector<8x128xf32>
    %cst_4 = arith.constant dense<0.000000e+00> : vector<8xf32>
    %11 = vector.multi_reduction <add>, %10, %cst_4 [1] : vector<8x128xf32> to vector<8xf32>
    %12 = vector.shape_cast %11 : vector<8xf32> to vector<8x1xf32>
    %cst_5 = arith.constant 9.600000e+01 : f32
    %13 = vector.broadcast %cst_5 : f32 to vector<8x1xf32>
    %14 = arith.mulf %13, %7 : vector<8x1xf32>
    %15 = arith.mulf %14, %7 : vector<8x1xf32>
    %16 = arith.subf %12, %15 : vector<8x1xf32>
    %cst_6 = arith.constant 3.125000e-02 : f32
    %17 = vector.broadcast %cst_6 : f32 to vector<8x1xf32>
    %18 = arith.mulf %16, %17 : vector<8x1xf32>
    %cst_7 = arith.constant 0.000000e+00 : f32
    %19 = vector.broadcast %cst_7 : f32 to vector<8x1xf32>
    %20 = arith.maximumf %18, %19 : vector<8x1xf32>
    %cst_8 = arith.constant 9.99999974E-6 : f32
    %21 = vector.broadcast %cst_8 : f32 to vector<8x1xf32>
    %22 = arith.addf %20, %21 : vector<8x1xf32>
    %23 = math.rsqrt %22 : vector<8x1xf32>
    %24 = vector.broadcast %23 : vector<8x1xf32> to vector<8x128xf32>
    %25 = arith.mulf %9, %24 : vector<8x128xf32>
    %26 = vector.broadcast %2 : vector<1x128xf32> to vector<8x128xf32>
    %27 = arith.mulf %25, %26 : vector<8x128xf32>
    %28 = vector.broadcast %3 : vector<1x128xf32> to vector<8x128xf32>
    %29 = arith.addf %27, %28 : vector<8x128xf32>
    %30 = arith.truncf %29 : vector<8x128xf32> to vector<8x128xbf16>
    %c0_9 = arith.constant 0 : index
    %c0_10 = arith.constant 0 : index
    %31 = vector.load %arg3[%c0_9, %c0_10] : memref<128x384xbf16, #tpu.memory_space<vmem>>, vector<128x384xbf16>
    %cst_11 = arith.constant dense<0.000000e+00> : vector<8x384xf32>
    %32 = tpu.matmul %30, %31, %cst_11 {dimension_numbers = #tpu.dot_dimension_numbers<[1], [0], [0], [1], [0, 0, 1, 1], [], []>} : vector<8x128xbf16>, vector<128x384xbf16>, vector<8x384xf32> -> vector<8x384xf32>
    %c0_12 = arith.constant 0 : index
    %c0_13 = arith.constant 0 : index
    %33 = vector.load %arg4[%c0_12, %c0_13] : memref<1x384xf32, #tpu.memory_space<vmem>>, vector<1x384xf32>
    %34 = vector.broadcast %33 : vector<1x384xf32> to vector<8x384xf32>
    %35 = arith.addf %32, %34 : vector<8x384xf32>
    %36 = vector.extract_strided_slice %35 {offsets = [0, 0], sizes = [8, 128], strides = [1, 1]} : vector<8x384xf32> to vector<8x128xf32>
    %cst_14 = arith.constant 0.176776692 : f32
    %37 = vector.broadcast %cst_14 : f32 to vector<8x128xf32>
    %38 = arith.mulf %36, %37 : vector<8x128xf32>
    %39 = arith.truncf %38 : vector<8x128xf32> to vector<8x128xbf16>
    %40 = vector.extract_strided_slice %35 {offsets = [0, 128], sizes = [8, 128], strides = [1, 1]} : vector<8x384xf32> to vector<8x128xf32>
    %41 = arith.truncf %40 : vector<8x128xf32> to vector<8x128xbf16>
    %42 = vector.extract_strided_slice %35 {offsets = [0, 256], sizes = [8, 128], strides = [1, 1]} : vector<8x384xf32> to vector<8x128xf32>
    %43 = arith.truncf %42 : vector<8x128xf32> to vector<8x128xbf16>
    "tpu.trace_start"() <{level = 10 : i32, message = "rd,kd->rk"}> : () -> ()
    %cst_15 = arith.constant dense<0.000000e+00> : vector<8x8xf32>
    %44 = tpu.matmul %39, %41, %cst_15 {dimension_numbers = #tpu.dot_dimension_numbers<[1], [1], [0], [0], [0, 0, 1, 0], [], []>} : vector<8x128xbf16>, vector<8x128xbf16>, vector<8x8xf32> -> vector<8x8xf32>
    "tpu.trace_stop"() : () -> ()
    %c0_16 = arith.constant 0 : index
    %c0_17 = arith.constant 0 : index
    %45 = vector.load %arg2[%c0_16, %c0_17] : memref<8x8xf32, #tpu.memory_space<vmem>>, vector<8x8xf32>
    %46 = arith.addf %44, %45 : vector<8x8xf32>
    %cst_18 = arith.constant dense<0xFF800000> : vector<8xf32>
    %47 = vector.multi_reduction <maximumf>, %46, %cst_18 [1] : vector<8x8xf32> to vector<8xf32>
    %48 = vector.shape_cast %47 : vector<8xf32> to vector<8x1xf32>
    %49 = vector.broadcast %48 : vector<8x1xf32> to vector<8x8xf32>
    %50 = arith.subf %46, %49 : vector<8x8xf32>
    %51 = math.exp %50 : vector<8x8xf32>
    %cst_19 = arith.constant dense<0.000000e+00> : vector<8xf32>
    %52 = vector.multi_reduction <add>, %51, %cst_19 [1] : vector<8x8xf32> to vector<8xf32>
    %53 = vector.shape_cast %52 : vector<8xf32> to vector<8x1xf32>
    %54 = tpu.reciprocal %53 {approx = true} : vector<8x1xf32> -> vector<8x1xf32>
    %55 = vector.broadcast %54 : vector<8x1xf32> to vector<8x8xf32>
    %56 = arith.mulf %51, %55 : vector<8x8xf32>
    %57 = arith.truncf %56 : vector<8x8xf32> to vector<8x8xbf16>
    %cst_20 = arith.constant dense<0.000000e+00> : vector<8x128xf32>
    %58 = tpu.matmul %57, %43, %cst_20 {dimension_numbers = #tpu.dot_dimension_numbers<[1], [0], [0], [1], [0, 0, 1, 1], [], []>} : vector<8x8xbf16>, vector<8x128xbf16>, vector<8x128xf32> -> vector<8x128xf32>
    %59 = arith.truncf %58 : vector<8x128xf32> to vector<8x128xbf16>
    %c0_21 = arith.constant 0 : index
    %c0_22 = arith.constant 0 : index
    %60 = vector.load %arg5[%c0_21, %c0_22] : memref<128x128xbf16, #tpu.memory_space<vmem>>, vector<128x128xbf16>
    %cst_23 = arith.constant dense<0.000000e+00> : vector<8x128xf32>
    %61 = tpu.matmul %59, %60, %cst_23 {dimension_numbers = #tpu.dot_dimension_numbers<[1], [0], [0], [1], [0, 0, 1, 1], [], []>} : vector<8x128xbf16>, vector<128x128xbf16>, vector<8x128xf32> -> vector<8x128xf32>
    %62 = vector.extract_strided_slice %0 {offsets = [6, 0], sizes = [1, 128], strides = [1, 1]} : vector<8x128xf32> to vector<1x128xf32>
    %63 = vector.broadcast %62 : vector<1x128xf32> to vector<8x128xf32>
    %64 = arith.addf %61, %63 : vector<8x128xf32>
    %65 = arith.addf %1, %64 : vector<8x128xf32>
    %66 = vector.extract_strided_slice %0 {offsets = [2, 0], sizes = [1, 128], strides = [1, 1]} : vector<8x128xf32> to vector<1x128xf32>
    %67 = vector.extract_strided_slice %0 {offsets = [3, 0], sizes = [1, 128], strides = [1, 1]} : vector<8x128xf32> to vector<1x128xf32>
    %cst_24 = arith.constant dense<0.000000e+00> : vector<8xf32>
    %68 = vector.multi_reduction <add>, %65, %cst_24 [1] : vector<8x128xf32> to vector<8xf32>
    %69 = vector.shape_cast %68 : vector<8xf32> to vector<8x1xf32>
    %cst_25 = arith.constant 3.125000e-02 : f32
    %70 = vector.broadcast %cst_25 : f32 to vector<8x1xf32>
    %71 = arith.mulf %69, %70 : vector<8x1xf32>
    %72 = vector.broadcast %71 : vector<8x1xf32> to vector<8x128xf32>
    %73 = arith.subf %65, %72 : vector<8x128xf32>
    %74 = arith.mulf %73, %73 : vector<8x128xf32>
    %cst_26 = arith.constant dense<0.000000e+00> : vector<8xf32>
    %75 = vector.multi_reduction <add>, %74, %cst_26 [1] : vector<8x128xf32> to vector<8xf32>
    %76 = vector.shape_cast %75 : vector<8xf32> to vector<8x1xf32>
    %cst_27 = arith.constant 9.600000e+01 : f32
    %77 = vector.broadcast %cst_27 : f32 to vector<8x1xf32>
    %78 = arith.mulf %77, %71 : vector<8x1xf32>
    %79 = arith.mulf %78, %71 : vector<8x1xf32>
    %80 = arith.subf %76, %79 : vector<8x1xf32>
    %cst_28 = arith.constant 3.125000e-02 : f32
    %81 = vector.broadcast %cst_28 : f32 to vector<8x1xf32>
    %82 = arith.mulf %80, %81 : vector<8x1xf32>
    %cst_29 = arith.constant 0.000000e+00 : f32
    %83 = vector.broadcast %cst_29 : f32 to vector<8x1xf32>
    %84 = arith.maximumf %82, %83 : vector<8x1xf32>
    %cst_30 = arith.constant 9.99999974E-6 : f32
    %85 = vector.broadcast %cst_30 : f32 to vector<8x1xf32>
    %86 = arith.addf %84, %85 : vector<8x1xf32>
    %87 = math.rsqrt %86 : vector<8x1xf32>
    %88 = vector.broadcast %87 : vector<8x1xf32> to vector<8x128xf32>
    %89 = arith.mulf %73, %88 : vector<8x128xf32>
    %90 = vector.broadcast %66 : vector<1x128xf32> to vector<8x128xf32>
    %91 = arith.mulf %89, %90 : vector<8x128xf32>
    %92 = vector.broadcast %67 : vector<1x128xf32> to vector<8x128xf32>
    %93 = arith.addf %91, %92 : vector<8x128xf32>
    %94 = arith.truncf %93 : vector<8x128xf32> to vector<8x128xbf16>
    %cst_31 = arith.constant 0.000000e+00 : f32
    %95 = vector.broadcast %cst_31 : f32 to vector<8x128xf32>
    %c0_32 = arith.constant 0 : index
    %c0_33 = arith.constant 0 : index
    %96 = vector.load %arg7[%c0_32, %c0_33] : memref<128x128xbf16, #tpu.memory_space<vmem>>, vector<128x128xbf16>
    %cst_34 = arith.constant dense<0.000000e+00> : vector<8x128xf32>
    %97 = tpu.matmul %94, %96, %cst_34 {dimension_numbers = #tpu.dot_dimension_numbers<[1], [0], [0], [1], [0, 0, 1, 1], [], []>} : vector<8x128xbf16>, vector<128x128xbf16>, vector<8x128xf32> -> vector<8x128xf32>
    %c0_35 = arith.constant 0 : index
    %c0_36 = arith.constant 0 : index
    %98 = vector.load %arg8[%c0_35, %c0_36] : memref<1x128xf32, #tpu.memory_space<vmem>>, vector<1x128xf32>
    %99 = vector.broadcast %98 : vector<1x128xf32> to vector<8x128xf32>
    %100 = arith.addf %97, %99 : vector<8x128xf32>
    %cst_37 = arith.constant 5.000000e-01 : f32
    %101 = vector.broadcast %cst_37 : f32 to vector<8x128xf32>
    %102 = arith.mulf %101, %100 : vector<8x128xf32>
    %cst_38 = arith.constant 0.707106769 : f32
    %103 = vector.broadcast %cst_38 : f32 to vector<8x128xf32>
    %104 = arith.mulf %100, %103 : vector<8x128xf32>
    %105 = math.erf %104 : vector<8x128xf32>
    %cst_39 = arith.constant 1.000000e+00 : f32
    %106 = vector.broadcast %cst_39 : f32 to vector<8x128xf32>
    %107 = arith.addf %106, %105 : vector<8x128xf32>
    %108 = arith.mulf %102, %107 : vector<8x128xf32>
    %109 = arith.truncf %108 : vector<8x128xf32> to vector<8x128xbf16>
    %c0_40 = arith.constant 0 : index
    %c0_41 = arith.constant 0 : index
    %110 = vector.load %arg9[%c0_40, %c0_41] : memref<128x128xbf16, #tpu.memory_space<vmem>>, vector<128x128xbf16>
    %cst_42 = arith.constant dense<0.000000e+00> : vector<8x128xf32>
    %111 = tpu.matmul %109, %110, %cst_42 {dimension_numbers = #tpu.dot_dimension_numbers<[1], [0], [0], [1], [0, 0, 1, 1], [], []>} : vector<8x128xbf16>, vector<128x128xbf16>, vector<8x128xf32> -> vector<8x128xf32>
    %112 = arith.addf %95, %111 : vector<8x128xf32>
    %113 = arith.addf %65, %112 : vector<8x128xf32>
    %114 = vector.extract_strided_slice %0 {offsets = [7, 0], sizes = [1, 128], strides = [1, 1]} : vector<8x128xf32> to vector<1x128xf32>
    %115 = vector.broadcast %114 : vector<1x128xf32> to vector<8x128xf32>
    %116 = arith.addf %113, %115 : vector<8x128xf32>
    %117 = vector.extract_strided_slice %0 {offsets = [4, 0], sizes = [1, 128], strides = [1, 1]} : vector<8x128xf32> to vector<1x128xf32>
    %118 = vector.extract_strided_slice %0 {offsets = [5, 0], sizes = [1, 128], strides = [1, 1]} : vector<8x128xf32> to vector<1x128xf32>
    %cst_43 = arith.constant dense<0.000000e+00> : vector<8xf32>
    %119 = vector.multi_reduction <add>, %116, %cst_43 [1] : vector<8x128xf32> to vector<8xf32>
    %120 = vector.shape_cast %119 : vector<8xf32> to vector<8x1xf32>
    %cst_44 = arith.constant 3.125000e-02 : f32
    %121 = vector.broadcast %cst_44 : f32 to vector<8x1xf32>
    %122 = arith.mulf %120, %121 : vector<8x1xf32>
    %123 = vector.broadcast %122 : vector<8x1xf32> to vector<8x128xf32>
    %124 = arith.subf %116, %123 : vector<8x128xf32>
    %125 = arith.mulf %124, %124 : vector<8x128xf32>
    %cst_45 = arith.constant dense<0.000000e+00> : vector<8xf32>
    %126 = vector.multi_reduction <add>, %125, %cst_45 [1] : vector<8x128xf32> to vector<8xf32>
    %127 = vector.shape_cast %126 : vector<8xf32> to vector<8x1xf32>
    %cst_46 = arith.constant 9.600000e+01 : f32
    %128 = vector.broadcast %cst_46 : f32 to vector<8x1xf32>
    %129 = arith.mulf %128, %122 : vector<8x1xf32>
    %130 = arith.mulf %129, %122 : vector<8x1xf32>
    %131 = arith.subf %127, %130 : vector<8x1xf32>
    %cst_47 = arith.constant 3.125000e-02 : f32
    %132 = vector.broadcast %cst_47 : f32 to vector<8x1xf32>
    %133 = arith.mulf %131, %132 : vector<8x1xf32>
    %cst_48 = arith.constant 0.000000e+00 : f32
    %134 = vector.broadcast %cst_48 : f32 to vector<8x1xf32>
    %135 = arith.maximumf %133, %134 : vector<8x1xf32>
    %cst_49 = arith.constant 9.99999974E-6 : f32
    %136 = vector.broadcast %cst_49 : f32 to vector<8x1xf32>
    %137 = arith.addf %135, %136 : vector<8x1xf32>
    %138 = math.rsqrt %137 : vector<8x1xf32>
    %139 = vector.broadcast %138 : vector<8x1xf32> to vector<8x128xf32>
    %140 = arith.mulf %124, %139 : vector<8x128xf32>
    %141 = vector.broadcast %117 : vector<1x128xf32> to vector<8x128xf32>
    %142 = arith.mulf %140, %141 : vector<8x128xf32>
    %143 = vector.broadcast %118 : vector<1x128xf32> to vector<8x128xf32>
    %144 = arith.addf %142, %143 : vector<8x128xf32>
    %145 = arith.truncf %144 : vector<8x128xf32> to vector<8x128xbf16>
    %c0_50 = arith.constant 0 : index
    %c0_51 = arith.constant 0 : index
    %146 = vector.load %arg10[%c0_50, %c0_51] : memref<128x128xbf16, #tpu.memory_space<vmem>>, vector<128x128xbf16>
    %cst_52 = arith.constant dense<0.000000e+00> : vector<8x128xf32>
    %147 = tpu.matmul %145, %146, %cst_52 {dimension_numbers = #tpu.dot_dimension_numbers<[1], [0], [0], [1], [0, 0, 1, 1], [], []>} : vector<8x128xbf16>, vector<128x128xbf16>, vector<8x128xf32> -> vector<8x128xf32>
    %c0_53 = arith.constant 0 : index
    %c0_54 = arith.constant 0 : index
    %148 = vector.load %arg11[%c0_53, %c0_54] : memref<1x128xf32, #tpu.memory_space<vmem>>, vector<1x128xf32>
    %149 = vector.broadcast %148 : vector<1x128xf32> to vector<8x128xf32>
    %150 = arith.addf %147, %149 : vector<8x128xf32>
    %c0_55 = arith.constant 0 : index
    %c0_56 = arith.constant 0 : index
    %151 = vector.load %arg12[%c0_55, %c0_56] : memref<8x128xf32, #tpu.memory_space<vmem>>, vector<8x128xf32>
    tpu.vector_store %arg12[%c0_55, %c0_56], %150 {strides = array<i32>} : memref<8x128xf32, #tpu.memory_space<vmem>>, vector<8x128xf32>,
    return
  }
  func.func @transform_0(%arg0: i32) -> (i32, i32) {
    %c0_i32 = arith.constant 0 : i32
    %c0_i32_0 = arith.constant 0 : i32
    return %arg0, %c0_i32 : i32, i32
  }
  func.func @transform_1(%arg0: i32) -> (i32, i32) {
    %c0_i32 = arith.constant 0 : i32
    %c0_i32_0 = arith.constant 0 : i32
    %c0_i32_1 = arith.constant 0 : i32
    return %c0_i32, %c0_i32_0 : i32, i32
  }
  func.func @transform_2(%arg0: i32) -> (i32, i32) {
    %c0_i32 = arith.constant 0 : i32
    %c0_i32_0 = arith.constant 0 : i32
    %c0_i32_1 = arith.constant 0 : i32
    return %c0_i32, %c0_i32_0 : i32, i32
  }
  func.func @transform_3(%arg0: i32) -> (i32, i32) {
    %c0_i32 = arith.constant 0 : i32
    %c0_i32_0 = arith.constant 0 : i32
    %c0_i32_1 = arith.constant 0 : i32
    return %c0_i32, %c0_i32_0 : i32, i32
  }
  func.func @transform_4(%arg0: i32) -> (i32, i32) {
    %c0_i32 = arith.constant 0 : i32
    %c0_i32_0 = arith.constant 0 : i32
    %c0_i32_1 = arith.constant 0 : i32
    return %c0_i32, %c0_i32_0 : i32, i32
  }
  func.func @transform_5(%arg0: i32) -> (i32, i32) {
    %c0_i32 = arith.constant 0 : i32
    %c0_i32_0 = arith.constant 0 : i32
    %c0_i32_1 = arith.constant 0 : i32
    return %c0_i32, %c0_i32_0 : i32, i32
  }
  func.func @transform_6(%arg0: i32) -> (i32, i32) {
    %c0_i32 = arith.constant 0 : i32
    %c0_i32_0 = arith.constant 0 : i32
    %c0_i32_1 = arith.constant 0 : i32
    return %c0_i32, %c0_i32_0 : i32, i32
  }
  func.func @transform_7(%arg0: i32) -> (i32, i32) {
    %c0_i32 = arith.constant 0 : i32
    %c0_i32_0 = arith.constant 0 : i32
    %c0_i32_1 = arith.constant 0 : i32
    return %c0_i32, %c0_i32_0 : i32, i32
  }
  func.func @transform_8(%arg0: i32) -> (i32, i32) {
    %c0_i32 = arith.constant 0 : i32
    %c0_i32_0 = arith.constant 0 : i32
    %c0_i32_1 = arith.constant 0 : i32
    return %c0_i32, %c0_i32_0 : i32, i32
  }
  func.func @transform_9(%arg0: i32) -> (i32, i32) {
    %c0_i32 = arith.constant 0 : i32
    %c0_i32_0 = arith.constant 0 : i32
    %c0_i32_1 = arith.constant 0 : i32
    return %c0_i32, %c0_i32_0 : i32, i32
  }
  func.func @transform_10(%arg0: i32) -> (i32, i32) {
    %c0_i32 = arith.constant 0 : i32
    %c0_i32_0 = arith.constant 0 : i32
    %c0_i32_1 = arith.constant 0 : i32
    return %c0_i32, %c0_i32_0 : i32, i32
  }
  func.func @transform_11(%arg0: i32) -> (i32, i32) {
    %c0_i32 = arith.constant 0 : i32
    %c0_i32_0 = arith.constant 0 : i32
    return %arg0, %c0_i32 : i32, i32
  }
}

</mosaic_0001>

<llo_original>
// kernel: tpu_custom_call.1
$region0: #{tpu_custom_call.1}
  #allocation0 [shape = 'u32[]', space=smem, size = 0x4, offset = 0x4, fixed_abs, tag = 'smem constant byte address 0x4 - core index']
  #allocation1 [shape = 'u32[144,128]{1,0:T(1,128)}', space=vmem, size = 0x12000, scoped, tag = 'internal scratch']
  %s0 = inlined_call_operand.hbm [shape: f32[16,128], index: 0, kind: input, shape index: {}]
  %s1 = inlined_call_operand.hbm [shape: f32[8,8], index: 1, kind: input, shape index: {}]
  %s2 = inlined_call_operand.hbm [shape: bf16[128,384], index: 2, kind: input, shape index: {}]
  %s3 = inlined_call_operand.hbm [shape: f32[1,384], index: 3, kind: input, shape index: {}]
  %s4 = inlined_call_operand.hbm [shape: bf16[128,128], index: 4, kind: input, shape index: {}]
  %s5 = inlined_call_operand.vmem [shape: f32[8,128], index: 5, kind: input, shape index: {}]
  %s6 = inlined_call_operand.hbm [shape: bf16[128,128], index: 6, kind: input, shape index: {}]
  %s7 = inlined_call_operand.vmem [shape: f32[1,128], index: 7, kind: input, shape index: {}]
  %s8 = inlined_call_operand.hbm [shape: bf16[128,128], index: 8, kind: input, shape index: {}]
  %s9 = inlined_call_operand.hbm [shape: bf16[128,128], index: 9, kind: input, shape index: {}]
  %s10 = inlined_call_operand.vmem [shape: f32[1,128], index: 10, kind: input, shape index: {}]
  %s11 = inlined_call_operand.hbm [shape: f32[16,128], index: 11, kind: output, shape index: {}]
  %s12 = sld [smem:[#allocation0]]
  $region109: #{tpu_custom_call.1} parent=0
    _
  %s14 = ssub.s32 1, %s12
  %s15 = scalar_select 0, %s14, %s12
  $region1: #{tpu_custom_call.1} parent=0
    #allocation2 [shape = 'u8[8192]{0}', space=vmem, size = 0x2000, scoped, tag = 'input window, operand 0']
    #allocation3 [shape = 's32[2]{0}', space=sflag, size = 0x8, scoped, tag = 'scoped memory for tpu_custom_call.1']
    #allocation4 [shape = 's32[2]{0}', space=sflag, size = 0x8, scoped, tag = 'scoped memory for tpu_custom_call.1']
    #allocation5 [shape = 'u8[4096]{0}', space=vmem, size = 0x1000, scoped, tag = 'input window, operand 1, single buffered']
    #allocation6 [shape = 's32[1]{0}', space=sflag, size = 0x4, scoped, tag = 'scoped memory for tpu_custom_call.1']
    #allocation7 [shape = 'u8[98304]{0}', space=vmem, size = 0x18000, scoped, tag = 'input window, operand 2, single buffered']
    #allocation8 [shape = 'u8[1536]{0}', space=vmem, size = 0x800, scoped, tag = 'input window, operand 3, single buffered']
    #allocation9 [shape = 's32[1]{0}', space=sflag, size = 0x4, scoped, tag = 'scoped memory for tpu_custom_call.1']
    #allocation10 [shape = 'u8[32768]{0}', space=vmem, size = 0x8000, scoped, tag = 'input window, operand 4, single buffered']
    #allocation11 [shape = 'u8[32768]{0}', space=vmem, size = 0x8000, scoped, tag = 'input window, operand 6, single buffered']
    #allocation12 [shape = 's32[1]{0}', space=sflag, size = 0x4, scoped, tag = 'scoped memory for tpu_custom_call.1']
    #allocation13 [shape = 'u8[32768]{0}', space=vmem, size = 0x8000, scoped, tag = 'input window, operand 8, single buffered']
    #allocation14 [shape = 'u8[32768]{0}', space=vmem, size = 0x8000, scoped, tag = 'input window, operand 9, single buffered']
    #allocation15 [shape = 's32[1]{0}', space=sflag, size = 0x4, scoped, tag = 'scoped memory for tpu_custom_call.1']
    #allocation16 [shape = 'u8[8192]{0}', space=vmem, size = 0x2000, scoped, tag = 'output window, operand 0']
    %16 = vsyncpa [#allocation3], 0
    %s17 = scalar_lea.sflag [#allocation3], 1
    %18 = vsyncpa %s17, 0
    %19 = vsyncpa [#allocation6], 0
    %20 = vsyncpa [#allocation9], 0
    %21 = vsyncpa [#allocation12], 0
    %22 = vsyncpa [#allocation15], 0
    %23 = vsyncpa [#allocation4], 0
    %s24 = scalar_lea.sflag [#allocation4], 1
    %25 = vsyncpa %s24, 0
    loop: start=0, step=1, limit=4
    $region2: #{tpu_custom_call.1} parent=1 // loop_pre_header
      _
    $region3: #{tpu_custom_call.1} parent=1 // loop_header
      %s27 = sphi 0, %s31
      %p28 = scmp.ge.s32.totalorder %s27, 4
      %s37 = sphi 0, %s39
      %s40 = sphi 0, %s37
      %s41 = sphi 0, %s40
      %s57 = sphi 0, %s41
      %s61 = sphi 0, %s61
      %s63 = sphi 0, %s61
      %s64 = sphi 0, %s63
      %s78 = sphi 0, %s64
      %s82 = sphi 0, %s82
      %s84 = sphi 0, %s82
      %s85 = sphi 0, %s84
      %s99 = sphi 0, %s85
      %s103 = sphi 0, %s103
      %s105 = sphi 0, %s103
      %s106 = sphi 0, %s105
      %s120 = sphi 0, %s106
      %s124 = sphi 0, %s124
      %s126 = sphi 0, %s124
      %s127 = sphi 0, %s126
      %s141 = sphi 0, %s127
      %s145 = sphi 0, %s145
      %s147 = sphi 0, %s145
      %s148 = sphi 0, %s147
      %s162 = sphi 0, %s148
      %s166 = sphi 0, %s166
      %s168 = sphi 0, %s166
      %s169 = sphi 0, %s168
      %s183 = sphi 0, %s169
      %s187 = sphi 0, %s187
      %s189 = sphi 0, %s187
      %s190 = sphi 0, %s189
      %s204 = sphi 0, %s190
      %s208 = sphi 0, %s208
      %s210 = sphi 0, %s208
      %s211 = sphi 0, %s210
      %s225 = sphi 0, %s211
      %s229 = sphi 0, %s229
      %s231 = sphi 0, %s229
      %s232 = sphi 0, %s231
      %s246 = sphi 0, %s232
      %s250 = sphi 0, %s250
      %s252 = sphi 0, %s250
      %s253 = sphi 0, %s252
      %s267 = sphi 0, %s253
      %s273 = sphi 0, %s275
      %s276 = sphi 0, %s273
      %s277 = sphi 0, %s276
      %s293 = sphi 0, %s277
    $region4: #{tpu_custom_call.1} parent=1 // loop_header_branch
      %30 = sbr.rel (%p28) target = $region8
    $region5: #{tpu_custom_call.1} parent=1 // loop_body
      %s32 = ssub.s32 %s27, 1
      %s33 = ssub.s32 %s27, 2
      %s34 = sadd.s32 %s27, 1
      %s35 = ssub.s32 %s27, %s34
      %p36 = scmp.eq.s32.totalorder %s35, 0
      %s38 = sadd.s32 %s37, 1
      %s39 = scalar_select %p36, %s37, %s38
      %p42 = pneg %p36
      %p43 = scmp.eq.s32.totalorder %s27, 1
      %p44 = por %p42, %p43
      %p45 = scmp.ne.s32.totalorder %s37, %s40
      %p46 = scmp.eq.s32.totalorder %s27, 0
      %p47 = por %p45, %p46
      %p48 = scmp.ne.s32.totalorder %s37, %s40
      %p49 = scmp.eq.s32.totalorder %s32, 1
      %p50 = por %p48, %p49
      %p51 = scmp.ne.s32.totalorder %s40, %s41
      %p52 = scmp.eq.s32.totalorder %s32, 0
      %p53 = por %p51, %p52
      %p54 = scmp.ne.s32.totalorder %s40, %s41
      %p55 = scmp.eq.s32.totalorder %s33, 1
      %p56 = por %p54, %p55
      %p58 = scmp.ne.s32.totalorder %s41, %s57
      %p59 = scmp.eq.s32.totalorder %s33, 0
      %p60 = por %p58, %p59
      %s62 = sadd.s32 %s61, 1
      %p65 = scmp.eq.s32.totalorder %s27, 1
      %p66 = scmp.ne.s32.totalorder %s61, %s63
      %p67 = scmp.eq.s32.totalorder %s27, 0
      %p68 = por %p66, %p67
      %p69 = scmp.ne.s32.totalorder %s61, %s63
      %p70 = scmp.eq.s32.totalorder %s32, 1
      %p71 = por %p69, %p70
      %p72 = scmp.ne.s32.totalorder %s63, %s64
      %p73 = scmp.eq.s32.totalorder %s32, 0
      %p74 = por %p72, %p73
      %p75 = scmp.ne.s32.totalorder %s63, %s64
      %p76 = scmp.eq.s32.totalorder %s33, 1
      %p77 = por %p75, %p76
      %p79 = scmp.ne.s32.totalorder %s64, %s78
      %p80 = scmp.eq.s32.totalorder %s33, 0
      %p81 = por %p79, %p80
      %s83 = sadd.s32 %s82, 1
      %p86 = scmp.eq.s32.totalorder %s27, 1
      %p87 = scmp.ne.s32.totalorder %s82, %s84
      %p88 = scmp.eq.s32.totalorder %s27, 0
      %p89 = por %p87, %p88
      %p90 = scmp.ne.s32.totalorder %s82, %s84
      %p91 = scmp.eq.s32.totalorder %s32, 1
      %p92 = por %p90, %p91
      %p93 = scmp.ne.s32.totalorder %s84, %s85
      %p94 = scmp.eq.s32.totalorder %s32, 0
      %p95 = por %p93, %p94
      %p96 = scmp.ne.s32.totalorder %s84, %s85
      %p97 = scmp.eq.s32.totalorder %s33, 1
      %p98 = por %p96, %p97
      %p100 = scmp.ne.s32.totalorder %s85, %s99
      %p101 = scmp.eq.s32.totalorder %s33, 0
      %p102 = por %p100, %p101
      %s104 = sadd.s32 %s103, 1
      %p107 = scmp.eq.s32.totalorder %s27, 1
      %p108 = scmp.ne.s32.totalorder %s103, %s105
      %p109 = scmp.eq.s32.totalorder %s27, 0
      %p110 = por %p108, %p109
      %p111 = scmp.ne.s32.totalorder %s103, %s105
      %p112 = scmp.eq.s32.totalorder %s32, 1
      %p113 = por %p111, %p112
      %p114 = scmp.ne.s32.totalorder %s105, %s106
      %p115 = scmp.eq.s32.totalorder %s32, 0
      %p116 = por %p114, %p115
      %p117 = scmp.ne.s32.totalorder %s105, %s106
      %p118 = scmp.eq.s32.totalorder %s33, 1
      %p119 = por %p117, %p118
      %p121 = scmp.ne.s32.totalorder %s106, %s120
      %p122 = scmp.eq.s32.totalorder %s33, 0
      %p123 = por %p121, %p122
      %s125 = sadd.s32 %s124, 1
      %p128 = scmp.eq.s32.totalorder %s27, 1
      %p129 = scmp.ne.s32.totalorder %s124, %s126
      %p130 = scmp.eq.s32.totalorder %s27, 0
      %p131 = por %p129, %p130
      %p132 = scmp.ne.s32.totalorder %s124, %s126
      %p133 = scmp.eq.s32.totalorder %s32, 1
      %p134 = por %p132, %p133
      %p135 = scmp.ne.s32.totalorder %s126, %s127
      %p136 = scmp.eq.s32.totalorder %s32, 0
      %p137 = por %p135, %p136
      %p138 = scmp.ne.s32.totalorder %s126, %s127
      %p139 = scmp.eq.s32.totalorder %s33, 1
      %p140 = por %p138, %p139
      %p142 = scmp.ne.s32.totalorder %s127, %s141
      %p143 = scmp.eq.s32.totalorder %s33, 0
      %p144 = por %p142, %p143
      %s146 = sadd.s32 %s145, 1
      %p149 = scmp.eq.s32.totalorder %s27, 1
      %p150 = scmp.ne.s32.totalorder %s145, %s147
      %p151 = scmp.eq.s32.totalorder %s27, 0
      %p152 = por %p150, %p151
      %p153 = scmp.ne.s32.totalorder %s145, %s147
      %p154 = scmp.eq.s32.totalorder %s32, 1
      %p155 = por %p153, %p154
      %p156 = scmp.ne.s32.totalorder %s147, %s148
      %p157 = scmp.eq.s32.totalorder %s32, 0
      %p158 = por %p156, %p157
      %p159 = scmp.ne.s32.totalorder %s147, %s148
      %p160 = scmp.eq.s32.totalorder %s33, 1
      %p161 = por %p159, %p160
      %p163 = scmp.ne.s32.totalorder %s148, %s162
      %p164 = scmp.eq.s32.totalorder %s33, 0
      %p165 = por %p163, %p164
      %s167 = sadd.s32 %s166, 1
      %p170 = scmp.eq.s32.totalorder %s27, 1
      %p171 = scmp.ne.s32.totalorder %s166, %s168
      %p172 = scmp.eq.s32.totalorder %s27, 0
      %p173 = por %p171, %p172
      %p174 = scmp.ne.s32.totalorder %s166, %s168
      %p175 = scmp.eq.s32.totalorder %s32, 1
      %p176 = por %p174, %p175
      %p177 = scmp.ne.s32.totalorder %s168, %s169
      %p178 = scmp.eq.s32.totalorder %s32, 0
      %p179 = por %p177, %p178
      %p180 = scmp.ne.s32.totalorder %s168, %s169
      %p181 = scmp.eq.s32.totalorder %s33, 1
      %p182 = por %p180, %p181
      %p184 = scmp.ne.s32.totalorder %s169, %s183
      %p185 = scmp.eq.s32.totalorder %s33, 0
      %p186 = por %p184, %p185
      %s188 = sadd.s32 %s187, 1
      %p191 = scmp.eq.s32.totalorder %s27, 1
      %p192 = scmp.ne.s32.totalorder %s187, %s189
      %p193 = scmp.eq.s32.totalorder %s27, 0
      %p194 = por %p192, %p193
      %p195 = scmp.ne.s32.totalorder %s187, %s189
      %p196 = scmp.eq.s32.totalorder %s32, 1
      %p197 = por %p195, %p196
      %p198 = scmp.ne.s32.totalorder %s189, %s190
      %p199 = scmp.eq.s32.totalorder %s32, 0
      %p200 = por %p198, %p199
      %p201 = scmp.ne.s32.totalorder %s189, %s190
      %p202 = scmp.eq.s32.totalorder %s33, 1
      %p203 = por %p201, %p202
      %p205 = scmp.ne.s32.totalorder %s190, %s204
      %p206 = scmp.eq.s32.totalorder %s33, 0
      %p207 = por %p205, %p206
      %s209 = sadd.s32 %s208, 1
      %p212 = scmp.eq.s32.totalorder %s27, 1
      %p213 = scmp.ne.s32.totalorder %s208, %s210
      %p214 = scmp.eq.s32.totalorder %s27, 0
      %p215 = por %p213, %p214
      %p216 = scmp.ne.s32.totalorder %s208, %s210
      %p217 = scmp.eq.s32.totalorder %s32, 1
      %p218 = por %p216, %p217
      %p219 = scmp.ne.s32.totalorder %s210, %s211
      %p220 = scmp.eq.s32.totalorder %s32, 0
      %p221 = por %p219, %p220
      %p222 = scmp.ne.s32.totalorder %s210, %s211
      %p223 = scmp.eq.s32.totalorder %s33, 1
      %p224 = por %p222, %p223
      %p226 = scmp.ne.s32.totalorder %s211, %s225
      %p227 = scmp.eq.s32.totalorder %s33, 0
      %p228 = por %p226, %p227
      %s230 = sadd.s32 %s229, 1
      %p233 = scmp.eq.s32.totalorder %s27, 1
      %p234 = scmp.ne.s32.totalorder %s229, %s231
      %p235 = scmp.eq.s32.totalorder %s27, 0
      %p236 = por %p234, %p235
      %p237 = scmp.ne.s32.totalorder %s229, %s231
      %p238 = scmp.eq.s32.totalorder %s32, 1
      %p239 = por %p237, %p238
      %p240 = scmp.ne.s32.totalorder %s231, %s232
      %p241 = scmp.eq.s32.totalorder %s32, 0
      %p242 = por %p240, %p241
      %p243 = scmp.ne.s32.totalorder %s231, %s232
      %p244 = scmp.eq.s32.totalorder %s33, 1
      %p245 = por %p243, %p244
      %p247 = scmp.ne.s32.totalorder %s232, %s246
      %p248 = scmp.eq.s32.totalorder %s33, 0
      %p249 = por %p247, %p248
      %s251 = sadd.s32 %s250, 1
      %p254 = scmp.eq.s32.totalorder %s27, 1
      %p255 = scmp.ne.s32.totalorder %s250, %s252
      %p256 = scmp.eq.s32.totalorder %s27, 0
      %p257 = por %p255, %p256
      %p258 = scmp.ne.s32.totalorder %s250, %s252
      %p259 = scmp.eq.s32.totalorder %s32, 1
      %p260 = por %p258, %p259
      %p261 = scmp.ne.s32.totalorder %s252, %s253
      %p262 = scmp.eq.s32.totalorder %s32, 0
      %p263 = por %p261, %p262
      %p264 = scmp.ne.s32.totalorder %s252, %s253
      %p265 = scmp.eq.s32.totalorder %s33, 1
      %p266 = por %p264, %p265
      %p268 = scmp.ne.s32.totalorder %s253, %s267
      %p269 = scmp.eq.s32.totalorder %s33, 0
      %p270 = por %p268, %p269
      %s271 = ssub.s32 %s27, %s34
      %p272 = scmp.eq.s32.totalorder %s271, 0
      %s274 = sadd.s32 %s273, 1
      %s275 = scalar_select %p272, %s273, %s274
      %p278 = pneg %p272
      %p279 = scmp.eq.s32.totalorder %s27, 1
      %p280 = por %p278, %p279
      %p281 = scmp.ne.s32.totalorder %s273, %s276
      %p282 = scmp.eq.s32.totalorder %s27, 0
      %p283 = por %p281, %p282
      %p284 = scmp.ne.s32.totalorder %s273, %s276
      %p285 = scmp.eq.s32.totalorder %s32, 1
      %p286 = por %p284, %p285
      %p287 = scmp.ne.s32.totalorder %s276, %s277
      %p288 = scmp.eq.s32.totalorder %s32, 0
      %p289 = por %p287, %p288
      %p290 = scmp.ne.s32.totalorder %s276, %s277
      %p291 = scmp.eq.s32.totalorder %s33, 1
      %p292 = por %p290, %p291
      %p294 = scmp.ne.s32.totalorder %s277, %s293
      %p295 = scmp.eq.s32.totalorder %s33, 0
      %p296 = por %p294, %p295
      %p297 = scmp.le.s32.totalorder 1, %s27
      %p298 = scmp.lt.s32.totalorder %s27, 3
      %p299 = pnand %p297, %p298
      %p300 = pneg %p299
      // Predicated region
      $region9: #{tpu_custom_call.1} parent=5 // pred_check
        _
      $region10: #{tpu_custom_call.1} parent=5 // pred_check_branch
        %302 = sbr.rel (%p299) target = $region12
      $region11: #{tpu_custom_call.1} parent=5 // pred_region
        %s303 = ssub.s32 %s27, 1
        // Predicated region
        $region13: #{tpu_custom_call.1} parent=11 // pred_check
          %p304 = pneg %p74
        $region14: #{tpu_custom_call.1} parent=11 // pred_check_branch
          %306 = sbr.rel (%p304) target = $region16
        $region15: #{tpu_custom_call.1} parent=11 // pred_region
          %s308 = ssub.s32 128, 128
          %309 = vsyncadd [#allocation6], %s308
          %s311 = sshll.u32 [#allocation5], 4
          %s312 = int_to_ptr.vmem [resolvable:$true] %s311
          %314 = dma.hbm_to_vmem [thread:$0]  %s1, 128, %s312, [#allocation6]
        $region16: #{tpu_custom_call.1} parent=11 // pred_fallthru
          _
        // Predicated region
        $region17: #{tpu_custom_call.1} parent=11 // pred_check
          %p315 = pneg %p95
        $region18: #{tpu_custom_call.1} parent=11 // pred_check_branch
          %317 = sbr.rel (%p315) target = $region20
        $region19: #{tpu_custom_call.1} parent=11 // pred_region
          %s319 = ssub.s32 3072, 3072
          %320 = vsyncadd [#allocation6], %s319
          %s321 = sshll.u32 [#allocation7], 4
          %s322 = int_to_ptr.vmem [resolvable:$true] %s321
          %327 = dma.hbm_to_vmem [thread:$0]  %s2, 3072, %s322, [#allocation6], 192, 192, 12
        $region20: #{tpu_custom_call.1} parent=11 // pred_fallthru
          _
        // Predicated region
        $region21: #{tpu_custom_call.1} parent=11 // pred_check
          %p328 = pneg %p116
        $region22: #{tpu_custom_call.1} parent=11 // pred_check_branch
          %330 = sbr.rel (%p328) target = $region24
        $region23: #{tpu_custom_call.1} parent=11 // pred_region
          %s332 = ssub.s32 48, 48
          %333 = vsyncadd [#allocation9], %s332
          %s335 = sshll.u32 [#allocation8], 4
          %s336 = int_to_ptr.vmem [resolvable:$true] %s335
          %338 = dma.hbm_to_vmem [thread:$0]  %s3, 48, %s336, [#allocation9]
        $region24: #{tpu_custom_call.1} parent=11 // pred_fallthru
          _
        // Predicated region
        $region25: #{tpu_custom_call.1} parent=11 // pred_check
          %p339 = pneg %p137
        $region26: #{tpu_custom_call.1} parent=11 // pred_check_branch
          %341 = sbr.rel (%p339) target = $region28
        $region27: #{tpu_custom_call.1} parent=11 // pred_region
          %s343 = ssub.s32 1024, 1024
          %344 = vsyncadd [#allocation9], %s343
          %s345 = sshll.u32 [#allocation10], 4
          %s346 = int_to_ptr.vmem [resolvable:$true] %s345
          %351 = dma.hbm_to_vmem [thread:$0]  %s4, 1024, %s346, [#allocation9], 64, 64, 4
        $region28: #{tpu_custom_call.1} parent=11 // pred_fallthru
          _
        // Predicated region
        $region29: #{tpu_custom_call.1} parent=11 // pred_check
          %p352 = pneg %p158
        $region30: #{tpu_custom_call.1} parent=11 // pred_check_branch
          %354 = sbr.rel (%p352) target = $region32
        $region31: #{tpu_custom_call.1} parent=11 // pred_region
          _
        $region32: #{tpu_custom_call.1} parent=11 // pred_fallthru
          _
        // Predicated region
        $region33: #{tpu_custom_call.1} parent=11 // pred_check
          %p355 = pneg %p179
        $region34: #{tpu_custom_call.1} parent=11 // pred_check_branch
          %357 = sbr.rel (%p355) target = $region36
        $region35: #{tpu_custom_call.1} parent=11 // pred_region
          %s359 = ssub.s32 1024, 1024
          %360 = vsyncadd [#allocation12], %s359
          %s361 = sshll.u32 [#allocation11], 4
          %s362 = int_to_ptr.vmem [resolvable:$true] %s361
          %367 = dma.hbm_to_vmem [thread:$0]  %s6, 1024, %s362, [#allocation12], 64, 64, 4
        $region36: #{tpu_custom_call.1} parent=11 // pred_fallthru
          _
        // Predicated region
        $region37: #{tpu_custom_call.1} parent=11 // pred_check
          %p368 = pneg %p200
        $region38: #{tpu_custom_call.1} parent=11 // pred_check_branch
          %370 = sbr.rel (%p368) target = $region40
        $region39: #{tpu_custom_call.1} parent=11 // pred_region
          _
        $region40: #{tpu_custom_call.1} parent=11 // pred_fallthru
          _
        // Predicated region
        $region41: #{tpu_custom_call.1} parent=11 // pred_check
          %p371 = pneg %p221
        $region42: #{tpu_custom_call.1} parent=11 // pred_check_branch
          %373 = sbr.rel (%p371) target = $region44
        $region43: #{tpu_custom_call.1} parent=11 // pred_region
          %s375 = ssub.s32 1024, 1024
          %376 = vsyncadd [#allocation12], %s375
          %s377 = sshll.u32 [#allocation13], 4
          %s378 = int_to_ptr.vmem [resolvable:$true] %s377
          %383 = dma.hbm_to_vmem [thread:$0]  %s8, 1024, %s378, [#allocation12], 64, 64, 4
        $region44: #{tpu_custom_call.1} parent=11 // pred_fallthru
          _
        // Predicated region
        $region45: #{tpu_custom_call.1} parent=11 // pred_check
          %p384 = pneg %p242
        $region46: #{tpu_custom_call.1} parent=11 // pred_check_branch
          %386 = sbr.rel (%p384) target = $region48
        $region47: #{tpu_custom_call.1} parent=11 // pred_region
          %s388 = ssub.s32 1024, 1024
          %389 = vsyncadd [#allocation15], %s388
          %s390 = sshll.u32 [#allocation14], 4
          %s391 = int_to_ptr.vmem [resolvable:$true] %s390
          %396 = dma.hbm_to_vmem [thread:$0]  %s9, 1024, %s391, [#allocation15], 64, 64, 4
        $region48: #{tpu_custom_call.1} parent=11 // pred_fallthru
          _
        // Predicated region
        $region49: #{tpu_custom_call.1} parent=11 // pred_check
          %p397 = pneg %p263
        $region50: #{tpu_custom_call.1} parent=11 // pred_check_branch
          %399 = sbr.rel (%p397) target = $region52
        $region51: #{tpu_custom_call.1} parent=11 // pred_region
          _
        $region52: #{tpu_custom_call.1} parent=11 // pred_fallthru
          _
      $region12: #{tpu_custom_call.1} parent=5 // pred_fallthru
        _
      %p400 = scmp.lt.s32.totalorder %s27, 2
      // Predicated region
      $region53: #{tpu_custom_call.1} parent=5 // pred_check
        %p401 = pneg %p400
      $region54: #{tpu_custom_call.1} parent=5 // pred_check_branch
        %403 = sbr.rel (%p401) target = $region56
      $region55: #{tpu_custom_call.1} parent=5 // pred_region
        // Predicated region
        $region57: #{tpu_custom_call.1} parent=55 // pred_check
          %p404 = pneg %p47
        $region58: #{tpu_custom_call.1} parent=55 // pred_check_branch
          %406 = sbr.rel (%p404) target = $region60
        $region59: #{tpu_custom_call.1} parent=55 // pred_region
          %s407 = sand.u32 %s37, 1
          %s408 = scalar_lea.sflag [#allocation3], %s407
          %s409 = sand.u32 %s37, 1
          %s410 = smul.addr %s409, 8
          %s411 = scalar_lea.vmem [#allocation2], %s410
          %s413 = ssub.s32 128, 128
          %414 = vsyncadd %s408, %s413
          %s415 = smul.addr %s27, 128
          %s416 = scalar_lea.hbm %s0, %s415
          %s418 = sshll.u32 %s411, 4
          %s419 = int_to_ptr.vmem [resolvable:$true] %s418
          %421 = dma.hbm_to_vmem [thread:$0]  %s416, 128, %s419, %s408
        $region60: #{tpu_custom_call.1} parent=55 // pred_fallthru
          _
      $region56: #{tpu_custom_call.1} parent=5 // pred_fallthru
        _
      %p422 = scmp.le.s32.totalorder 1, %s27
      %p423 = scmp.lt.s32.totalorder %s27, 3
      %p424 = pnand %p422, %p423
      %p425 = pneg %p424
      // Predicated region
      $region61: #{tpu_custom_call.1} parent=5 // pred_check
        _
      $region62: #{tpu_custom_call.1} parent=5 // pred_check_branch
        %427 = sbr.rel (%p424) target = $region64
      $region63: #{tpu_custom_call.1} parent=5 // pred_region
        %s428 = ssub.s32 %s27, 1
        %s429 = sand.u32 %s40, 1
        %s430 = scalar_lea.sflag [#allocation3], %s429
        %s431 = sand.u32 %s40, 1
        %s432 = smul.addr %s431, 8
        %s433 = scalar_lea.vmem [#allocation2], %s432
        // Predicated region
        $region65: #{tpu_custom_call.1} parent=63 // pred_check
          %p434 = pneg %p53
        $region66: #{tpu_custom_call.1} parent=63 // pred_check_branch
          %436 = sbr.rel (%p434) target = $region68
        $region67: #{tpu_custom_call.1} parent=63 // pred_region
          %437 = dma.done %s430, 128
        $region68: #{tpu_custom_call.1} parent=63 // pred_fallthru
          _
        // Predicated region
        $region69: #{tpu_custom_call.1} parent=63 // pred_check
          %p438 = pneg %p74
        $region70: #{tpu_custom_call.1} parent=63 // pred_check_branch
          %440 = sbr.rel (%p438) target = $region72
        $region71: #{tpu_custom_call.1} parent=63 // pred_region
          %441 = dma.done [#allocation6], 128
        $region72: #{tpu_custom_call.1} parent=63 // pred_fallthru
          _
        // Predicated region
        $region73: #{tpu_custom_call.1} parent=63 // pred_check
          %p442 = pneg %p95
        $region74: #{tpu_custom_call.1} parent=63 // pred_check_branch
          %444 = sbr.rel (%p442) target = $region76
        $region75: #{tpu_custom_call.1} parent=63 // pred_region
          %445 = dma.done [#allocation6], 3072
        $region76: #{tpu_custom_call.1} parent=63 // pred_fallthru
          _
        // Predicated region
        $region77: #{tpu_custom_call.1} parent=63 // pred_check
          %p446 = pneg %p116
        $region78: #{tpu_custom_call.1} parent=63 // pred_check_branch
          %448 = sbr.rel (%p446) target = $region80
        $region79: #{tpu_custom_call.1} parent=63 // pred_region
          %449 = dma.done [#allocation9], 48
        $region80: #{tpu_custom_call.1} parent=63 // pred_fallthru
          _
        // Predicated region
        $region81: #{tpu_custom_call.1} parent=63 // pred_check
          %p450 = pneg %p137
        $region82: #{tpu_custom_call.1} parent=63 // pred_check_branch
          %452 = sbr.rel (%p450) target = $region84
        $region83: #{tpu_custom_call.1} parent=63 // pred_region
          %453 = dma.done [#allocation9], 1024
        $region84: #{tpu_custom_call.1} parent=63 // pred_fallthru
          _
        // Predicated region
        $region85: #{tpu_custom_call.1} parent=63 // pred_check
          %p454 = pneg %p179
        $region86: #{tpu_custom_call.1} parent=63 // pred_check_branch
          %456 = sbr.rel (%p454) target = $region88
        $region87: #{tpu_custom_call.1} parent=63 // pred_region
          %457 = dma.done [#allocation12], 1024
        $region88: #{tpu_custom_call.1} parent=63 // pred_fallthru
          _
        // Predicated region
        $region89: #{tpu_custom_call.1} parent=63 // pred_check
          %p458 = pneg %p221
        $region90: #{tpu_custom_call.1} parent=63 // pred_check_branch
          %460 = sbr.rel (%p458) target = $region92
        $region91: #{tpu_custom_call.1} parent=63 // pred_region
          %461 = dma.done [#allocation12], 1024
        $region92: #{tpu_custom_call.1} parent=63 // pred_fallthru
          _
        // Predicated region
        $region93: #{tpu_custom_call.1} parent=63 // pred_check
          %p462 = pneg %p242
        $region94: #{tpu_custom_call.1} parent=63 // pred_check_branch
          %464 = sbr.rel (%p462) target = $region96
        $region95: #{tpu_custom_call.1} parent=63 // pred_region
          %465 = dma.done [#allocation15], 1024
        $region96: #{tpu_custom_call.1} parent=63 // pred_fallthru
          _
        %s466 = sand.u32 %s40, 1
        %s467 = scalar_lea.sflag [#allocation3], %s466
        %s468 = sand.u32 %s40, 1
        %s469 = smul.addr %s468, 8
        %s470 = scalar_lea.vmem [#allocation2], %s469
        %p471 = pneg %p53
        %p472 = pneg %p50
        %p473 = pneg %p74
        %p474 = pneg %p71
        %p475 = pneg %p95
        %p476 = pneg %p92
        %p477 = pneg %p116
        %p478 = pneg %p113
        %p479 = pneg %p137
        %p480 = pneg %p134
        %p481 = pneg %p158
        %p482 = pneg %p155
        %p483 = pneg %p179
        %p484 = pneg %p176
        %p485 = pneg %p200
        %p486 = pneg %p197
        %p487 = pneg %p221
        %p488 = pneg %p218
        %p489 = pneg %p242
        %p490 = pneg %p239
        %p491 = pneg %p263
        %p492 = pneg %p260
        %p493 = pneg %p289
        %p494 = pneg %p286
        %s495 = sand.u32 %s276, 1
        %s496 = scalar_lea.sflag [#allocation4], %s495
        %s497 = sand.u32 %s276, 1
        %s498 = smul.addr %s497, 8
        %s499 = scalar_lea.vmem [#allocation16], %s498
        %v501 = vld [vmem:[%s5] sm:$0xff]
        %v502 = vld [vmem:[%s433] sm:$0xff]
        %503 = vadd.xlane.f32.xlu0 %v502
        %v504 = vpop.xlane.xlu0 %503
        %v505 = vmul.f32 %v504, 0.03125
        %v506 = vsub.f32 %v502, %v505
        %v507 = vmul.f32 %v506, %v506
        %508 = vadd.xlane.f32.xlu0 %v507
        %v509 = vpop.xlane.xlu0 %508
        %v510 = vmul.f32 %v505, 96.0
        %v511 = vmul.f32 %v510, %v505
        %v512 = vsub.f32 %v509, %v511
        %v513 = vmul.f32 %v512, 0.03125
        %v514 = vmax.f32 %v513, 0.0
        %v515 = vadd.f32 %v514, 1e-05
        %v516 = vrsqrt.pop %v515
        %v517 = vmul.f32 %v506, %v516
        %v518 = vlaneseq
        %v519 = vshrl.u32 %v518, 7
        %v520 = vsub.s32 0, %v519
        %v521 = vrot.slane %v501, %v520
        %v522 = vmul.f32 %v517, %v521
        %v523 = vlaneseq
        %v524 = vshrl.u32 %v523, 7
        %v525 = vsub.s32 1, %v524
        %v526 = vrot.slane %v501, %v525
        %v527 = vadd.f32 %v522, %v526
        %v528 = vpack.c.bf16 %v527, %v527
        %v529 = vld [vmem:[#allocation7] sm:$0xff]
        %v530 = vld [vmem:[#allocation7 + $0x8] sm:$0xf]
        %v531 = vld [vmem:[#allocation7 + $0xc] sm:$0xff]
        %v532 = vld [vmem:[#allocation7 + $0x14] sm:$0xf]
        %v533 = vld [vmem:[#allocation7 + $0x18] sm:$0xff]
        %v534 = vld [vmem:[#allocation7 + $0x20] sm:$0xf]
        %v535 = vld [vmem:[#allocation7 + $0x24] sm:$0xff]
        %v536 = vld [vmem:[#allocation7 + $0x2c] sm:$0xf]
        %v537 = vld [vmem:[#allocation7 + $0x30] sm:$0xff]
        %v538 = vld [vmem:[#allocation7 + $0x38] sm:$0xf]
        %v539 = vld [vmem:[#allocation7 + $0x3c] sm:$0xff]
        %v540 = vld [vmem:[#allocation7 + $0x44] sm:$0xf]
        %v541 = vld [vmem:[#allocation7 + $0x48] sm:$0xff]
        %v542 = vld [vmem:[#allocation7 + $0x50] sm:$0xf]
        %v543 = vld [vmem:[#allocation7 + $0x54] sm:$0xff]
        %v544 = vld [vmem:[#allocation7 + $0x5c] sm:$0xf]
        %v545 = vld [vmem:[#allocation7 + $0x60] sm:$0xff]
        %v546 = vld [vmem:[#allocation7 + $0x68] sm:$0xf]
        %v547 = vld [vmem:[#allocation7 + $0x6c] sm:$0xff]
        %v548 = vld [vmem:[#allocation7 + $0x74] sm:$0xf]
        %v549 = vld [vmem:[#allocation7 + $0x78] sm:$0xff]
        %v550 = vld [vmem:[#allocation7 + $0x80] sm:$0xf]
        %v551 = vld [vmem:[#allocation7 + $0x84] sm:$0xff]
        %v552 = vld [vmem:[#allocation7 + $0x8c] sm:$0xf]
        %v553 = vld [vmem:[#allocation7 + $0x90] sm:$0xff]
        %v554 = vld [vmem:[#allocation7 + $0x98] sm:$0xf]
        %v555 = vld [vmem:[#allocation7 + $0x9c] sm:$0xff]
        %v556 = vld [vmem:[#allocation7 + $0xa4] sm:$0xf]
        %v557 = vld [vmem:[#allocation7 + $0xa8] sm:$0xff]
        %v558 = vld [vmem:[#allocation7 + $0xb0] sm:$0xf]
        %v559 = vld [vmem:[#allocation7 + $0xb4] sm:$0xff]
        %v560 = vld [vmem:[#allocation7 + $0xbc] sm:$0xf]
        %v561 = vld [vmem:[#allocation8] sm:$0x7]
        %v563 = vlaneseq
        %v564 = vshrl.u32 %v563, 7
        %v565 = vsub.s32 0, %v564
        %v566 = vrot.slane %v561, %v565
        %v567 = vlaneseq
        %v568 = vshrl.u32 %v567, 7
        %v569 = vsub.s32 1, %v568
        %v570 = vrot.slane %v561, %v569
        %v571 = vlaneseq
        %v572 = vshrl.u32 %v571, 7
        %v573 = vsub.s32 2, %v572
        %v574 = vrot.slane %v561, %v573
        %v610 = vunpack.c.l.b16 %v529
        %v611 = vunpack.c.h.b16 %v529
        %v612 = vunpack.c.l.b16 %v530
        %v613 = vunpack.c.l.b16 %v531
        %v614 = vunpack.c.h.b16 %v531
        %v615 = vunpack.c.l.b16 %v532
        %v616 = vunpack.c.l.b16 %v533
        %v617 = vunpack.c.h.b16 %v533
        %v618 = vunpack.c.l.b16 %v534
        %v619 = vunpack.c.l.b16 %v535
        %v620 = vunpack.c.h.b16 %v535
        %v621 = vunpack.c.l.b16 %v536
        %v622 = vunpack.c.l.b16 %v537
        %v623 = vunpack.c.h.b16 %v537
        %v624 = vunpack.c.l.b16 %v538
        %v625 = vunpack.c.l.b16 %v539
        %v626 = vunpack.c.h.b16 %v539
        %v627 = vunpack.c.l.b16 %v540
        %v628 = vunpack.c.l.b16 %v541
        %v629 = vunpack.c.h.b16 %v541
        %v630 = vunpack.c.l.b16 %v542
        %v631 = vunpack.c.l.b16 %v543
        %v632 = vunpack.c.h.b16 %v543
        %v633 = vunpack.c.l.b16 %v544
        %v634 = vunpack.c.l.b16 %v545
        %v635 = vunpack.c.h.b16 %v545
        %v636 = vunpack.c.l.b16 %v546
        %v637 = vunpack.c.l.b16 %v547
        %v638 = vunpack.c.h.b16 %v547
        %v639 = vunpack.c.l.b16 %v548
        %v640 = vunpack.c.l.b16 %v549
        %v641 = vunpack.c.h.b16 %v549
        %v642 = vunpack.c.l.b16 %v550
        %v643 = vunpack.c.l.b16 %v551
        %v644 = vunpack.c.h.b16 %v551
        %v645 = vunpack.c.l.b16 %v552
        %v646 = vunpack.c.l.b16 %v553
        %v647 = vunpack.c.h.b16 %v553
        %v648 = vunpack.c.l.b16 %v554
        %v649 = vunpack.c.l.b16 %v555
        %v650 = vunpack.c.h.b16 %v555
        %v651 = vunpack.c.l.b16 %v556
        %v652 = vunpack.c.l.b16 %v557
        %v653 = vunpack.c.h.b16 %v557
        %v654 = vunpack.c.l.b16 %v558
        %v655 = vunpack.c.l.b16 %v559
        %v656 = vunpack.c.h.b16 %v559
        %v657 = vunpack.c.l.b16 %v560
        %v658 = vpack.c.b16 %v613, %v610
        %v659 = vpack.c.b16 %v614, %v611
        %v660 = vpack.c.b16 %v615, %v612
        %v661 = vpack.c.b16 %v619, %v616
        %v662 = vpack.c.b16 %v620, %v617
        %v663 = vpack.c.b16 %v621, %v618
        %v664 = vpack.c.b16 %v625, %v622
        %v665 = vpack.c.b16 %v626, %v623
        %v666 = vpack.c.b16 %v627, %v624
        %v667 = vpack.c.b16 %v631, %v628
        %v668 = vpack.c.b16 %v632, %v629
        %v669 = vpack.c.b16 %v633, %v630
        %v670 = vpack.c.b16 %v637, %v634
        %v671 = vpack.c.b16 %v638, %v635
        %v672 = vpack.c.b16 %v639, %v636
        %v673 = vpack.c.b16 %v643, %v640
        %v674 = vpack.c.b16 %v644, %v641
        %v675 = vpack.c.b16 %v645, %v642
        %v676 = vpack.c.b16 %v649, %v646
        %v677 = vpack.c.b16 %v650, %v647
        %v678 = vpack.c.b16 %v651, %v648
        %v679 = vpack.c.b16 %v655, %v652
        %v680 = vpack.c.b16 %v656, %v653
        %v681 = vpack.c.b16 %v657, %v654
        %706 = vmatprep.subr.bf16.mxu0 %v680
        %707 = vmatpush1.bf16.msra.mxu0 %v679
        %708 = vmatprep.subr.bf16.mxu0 %v677
        %709 = vmatpush1.bf16.msra.mxu0 %v676
        %710 = vmatprep.subr.bf16.mxu0 %v674
        %711 = vmatpush1.bf16.msra.mxu0 %v673
        %712 = vmatprep.subr.bf16.mxu0 %v671
        %713 = vmatpush1.bf16.msra.mxu0 %v670
        %714 = vmatprep.subr.bf16.mxu0 %v668
        %715 = vmatpush1.bf16.msra.mxu0 %v667
        %716 = vmatprep.subr.bf16.mxu0 %v665
        %717 = vmatpush1.bf16.msra.mxu0 %v664
        %718 = vmatprep.subr.bf16.mxu0 %v662
        %719 = vmatpush1.bf16.msra.mxu0 %v661
        %720 = vmatprep.subr.bf16.mxu0 %v659
        %721 = vmatpush1.bf16.msra.mxu0 %v658
        %722 = vmatprep.subr.bf16.mxu0 0
        %723 = vmatpush2.bf16.msra.mxu0 0
        %724 = vmatprep.subr.bf16.mxu0 0
        %725 = vmatpush2.bf16.msra.mxu0 0
        %726 = vmatprep.subr.bf16.mxu0 0
        %727 = vmatpush2.bf16.msra.mxu0 0
        %728 = vmatprep.subr.bf16.mxu0 0
        %729 = vmatpush2.bf16.msra.mxu0 0
        %730 = vmatprep.subr.bf16.mxu0 0
        %731 = vmatpush2.bf16.msra.mxu0 0
        %732 = vmatprep.subr.bf16.mxu0 0
        %733 = vmatpush2.bf16.msra.mxu0 0
        %734 = vmatprep.subr.bf16.mxu0 0
        %735 = vmatpush2.bf16.msra.mxu0 0
        %736 = vmatprep.subr.bf16.mxu0 0
        %737 = vmatpush2.bf16.msra.mxu0 0
        %738 = vmatprep.mubr.bf16.mxu0 0
        %739 = vmatmul.mubr.bf16.gmra.mxu0 %v528
        %v740 = vpop.f32.mrf.mxu0
        %v741 = vadd.f32 %v566, %v740
        %v742 = vpop.f32.mrf.mxu0
        %v743 = vadd.f32 %v570, %v742
        %v744 = vpop.f32.mrf.mxu0
        %v745 = vpop.f32.mrf.mxu0
        %746 = vdwg.mxu0
        %747 = vmatprep.subr.bf16.mxu0 0
        %748 = vmatpush1.bf16.msra.mxu0 %v681
        %749 = vmatprep.subr.bf16.mxu0 0
        %750 = vmatpush1.bf16.msra.mxu0 %v678
        %751 = vmatprep.subr.bf16.mxu0 0
        %752 = vmatpush1.bf16.msra.mxu0 %v675
        %753 = vmatprep.subr.bf16.mxu0 0
        %754 = vmatpush1.bf16.msra.mxu0 %v672
        %755 = vmatprep.subr.bf16.mxu0 0
        %756 = vmatpush1.bf16.msra.mxu0 %v669
        %757 = vmatprep.subr.bf16.mxu0 0
        %758 = vmatpush1.bf16.msra.mxu0 %v666
        %759 = vmatprep.subr.bf16.mxu0 0
        %760 = vmatpush1.bf16.msra.mxu0 %v663
        %761 = vmatprep.subr.bf16.mxu0 0
        %762 = vmatpush1.bf16.msra.mxu0 %v660
        %763 = vmatprep.subr.bf16.mxu0 0
        %764 = vmatpush2.bf16.msra.mxu0 0
        %765 = vmatprep.subr.bf16.mxu0 0
        %766 = vmatpush2.bf16.msra.mxu0 0
        %767 = vmatprep.subr.bf16.mxu0 0
        %768 = vmatpush2.bf16.msra.mxu0 0
        %769 = vmatprep.subr.bf16.mxu0 0
        %770 = vmatpush2.bf16.msra.mxu0 0
        %771 = vmatprep.subr.bf16.mxu0 0
        %772 = vmatpush2.bf16.msra.mxu0 0
        %773 = vmatprep.subr.bf16.mxu0 0
        %774 = vmatpush2.bf16.msra.mxu0 0
        %775 = vmatprep.subr.bf16.mxu0 0
        %776 = vmatpush2.bf16.msra.mxu0 0
        %777 = vmatprep.subr.bf16.mxu0 0
        %778 = vmatpush2.bf16.msra.mxu0 0
        %779 = vmatprep.mubr.bf16.mxu0 0
        %780 = vmatmul.mubr.bf16.gmra.mxu0 %v528
        %v781 = vpop.f32.mrf.mxu0
        %v782 = vadd.f32 %v574, %v781
        %v783 = vpop.f32.mrf.mxu0
        %v784 = vpop.f32.mrf.mxu0
        %v785 = vpop.f32.mrf.mxu0
        %786 = vdwg.mxu0
        %v787 = vmul.f32 %v741, 0.17677669
        %v788 = vpack.c.bf16 %v787, %v787
        %v789 = vpack.c.bf16 %v743, %v743
        %v790 = vpack.c.bf16 %v782, %v782
        %v791 = vld [vmem:[#allocation5] sm:$0xff]
        %792 = vmatprep.subr.bf16.mxu0 0
        %793 = vmatpush1.bf16.xpose.msra.mxu0 0
        %794 = vmatprep.subr.bf16.mxu0 0
        %795 = vmatpush1.bf16.xpose.msra.mxu0 0
        %796 = vmatprep.subr.bf16.mxu0 0
        %797 = vmatpush1.bf16.xpose.msra.mxu0 0
        %798 = vmatprep.subr.bf16.mxu0 0
        %799 = vmatpush1.bf16.xpose.msra.mxu0 0
        %800 = vmatprep.subr.bf16.mxu0 0
        %801 = vmatpush1.bf16.xpose.msra.mxu0 0
        %802 = vmatprep.subr.bf16.mxu0 0
        %803 = vmatpush1.bf16.xpose.msra.mxu0 0
        %804 = vmatprep.subr.bf16.mxu0 0
        %805 = vmatpush1.bf16.xpose.msra.mxu0 0
        %806 = vmatprep.subr.bf16.mxu0 0
        %807 = vmatpush1.bf16.xpose.msra.mxu0 %v789
        %808 = vmatprep.subr.bf16.mxu0 0
        %809 = vmatpush2.bf16.xpose.msra.mxu0 0
        %810 = vmatprep.subr.bf16.mxu0 0
        %811 = vmatpush2.bf16.xpose.msra.mxu0 0
        %812 = vmatprep.subr.bf16.mxu0 0
        %813 = vmatpush2.bf16.xpose.msra.mxu0 0
        %814 = vmatprep.subr.bf16.mxu0 0
        %815 = vmatpush2.bf16.xpose.msra.mxu0 0
        %816 = vmatprep.subr.bf16.mxu0 0
        %817 = vmatpush2.bf16.xpose.msra.mxu0 0
        %818 = vmatprep.subr.bf16.mxu0 0
        %819 = vmatpush2.bf16.xpose.msra.mxu0 0
        %820 = vmatprep.subr.bf16.mxu0 0
        %821 = vmatpush2.bf16.xpose.msra.mxu0 0
        %822 = vmatprep.subr.bf16.mxu0 0
        %823 = vmatpush2.bf16.xpose.msra.mxu0 0
        %824 = vmatprep.mubr.bf16.mxu0 0
        %825 = vmatmul.mubr.bf16.gmra.mxu0 %v788
        %v826 = vpop.f32.mrf.mxu0
        %v827 = vadd.f32 %v791, %v826
        %v828 = vpop.f32.mrf.mxu0
        %v829 = vpop.f32.mrf.mxu0
        %v830 = vpop.f32.mrf.mxu0
        %831 = vdwg.mxu0
        %vm832 = vcmask 64512
        %v833 = vsel %vm832, %v827, -inf
        %834 = vmax.xlane.f32.xlu0 %v833
        %v835 = vpop.xlane.xlu0 %834
        %v836 = vsub.f32 %v827, %v835
        %v837 = vmul.f32 %v836, 1.442695
        %v838 = vpow.pop %v837
        %v839 = vsel %vm832, %v838, 0.0
        %840 = vadd.xlane.f32.xlu0 %v839
        %v841 = vpop.xlane.xlu0 %840
        %v842 = vrcp.pop %v841
        %v843 = vmul.f32 %v838, %v842
        %v844 = vpack.c.bf16 %v843, %v843
        %v846 = vsel %vm832, %v844, 0
        %vm848 = vcmask 1043456
        %v850 = vsel %vm848, %v790, 0
        %852 = vmatprep.subr.bf16.mxu0 0
        %853 = vmatpush1.bf16.msra.mxu0 0
        %854 = vmatprep.subr.bf16.mxu0 0
        %855 = vmatpush1.bf16.msra.mxu0 0
        %856 = vmatprep.subr.bf16.mxu0 0
        %857 = vmatpush1.bf16.msra.mxu0 0
        %858 = vmatprep.subr.bf16.mxu0 0
        %859 = vmatpush1.bf16.msra.mxu0 0
        %860 = vmatprep.subr.bf16.mxu0 0
        %861 = vmatpush1.bf16.msra.mxu0 0
        %862 = vmatprep.subr.bf16.mxu0 0
        %863 = vmatpush1.bf16.msra.mxu0 0
        %864 = vmatprep.subr.bf16.mxu0 0
        %865 = vmatpush1.bf16.msra.mxu0 0
        %866 = vmatprep.subr.bf16.mxu0 0
        %867 = vmatpush1.bf16.msra.mxu0 %v850
        %868 = vmatprep.subr.bf16.mxu0 0
        %869 = vmatpush2.bf16.msra.mxu0 0
        %870 = vmatprep.subr.bf16.mxu0 0
        %871 = vmatpush2.bf16.msra.mxu0 0
        %872 = vmatprep.subr.bf16.mxu0 0
        %873 = vmatpush2.bf16.msra.mxu0 0
        %874 = vmatprep.subr.bf16.mxu0 0
        %875 = vmatpush2.bf16.msra.mxu0 0
        %876 = vmatprep.subr.bf16.mxu0 0
        %877 = vmatpush2.bf16.msra.mxu0 0
        %878 = vmatprep.subr.bf16.mxu0 0
        %879 = vmatpush2.bf16.msra.mxu0 0
        %880 = vmatprep.subr.bf16.mxu0 0
        %881 = vmatpush2.bf16.msra.mxu0 0
        %882 = vmatprep.subr.bf16.mxu0 0
        %883 = vmatpush2.bf16.msra.mxu0 0
        %884 = vmatprep.mubr.bf16.mxu0 0
        %885 = vmatmul.mubr.bf16.gmra.mxu0 %v846
        %v886 = vpop.f32.mrf.mxu0
        %v887 = vadd.f32 0.0, %v886
        %v888 = vpop.f32.mrf.mxu0
        %v889 = vpop.f32.mrf.mxu0
        %v890 = vpop.f32.mrf.mxu0
        %891 = vdwg.mxu0
        %v892 = vpack.c.bf16 %v887, %v887
        %v893 = vld [vmem:[#allocation10] sm:$0xf]
        %v894 = vld [vmem:[#allocation10 + $0x4] sm:$0xf]
        %v895 = vld [vmem:[#allocation10 + $0x8] sm:$0xf]
        %v896 = vld [vmem:[#allocation10 + $0xc] sm:$0xf]
        %v897 = vld [vmem:[#allocation10 + $0x10] sm:$0xf]
        %v898 = vld [vmem:[#allocation10 + $0x14] sm:$0xf]
        %v899 = vld [vmem:[#allocation10 + $0x18] sm:$0xf]
        %v900 = vld [vmem:[#allocation10 + $0x1c] sm:$0xf]
        %v901 = vld [vmem:[#allocation10 + $0x20] sm:$0xf]
        %v902 = vld [vmem:[#allocation10 + $0x24] sm:$0xf]
        %v903 = vld [vmem:[#allocation10 + $0x28] sm:$0xf]
        %v904 = vld [vmem:[#allocation10 + $0x2c] sm:$0xf]
        %v905 = vld [vmem:[#allocation10 + $0x30] sm:$0xf]
        %v906 = vld [vmem:[#allocation10 + $0x34] sm:$0xf]
        %v907 = vld [vmem:[#allocation10 + $0x38] sm:$0xf]
        %v908 = vld [vmem:[#allocation10 + $0x3c] sm:$0xf]
        %v909 = vlaneseq
        %v910 = vshrl.u32 %v909, 7
        %v911 = vsub.s32 6, %v910
        %v912 = vrot.slane %v501, %v911
        %v929 = vunpack.c.l.b16 %v893
        %v930 = vunpack.c.l.b16 %v894
        %v931 = vunpack.c.l.b16 %v895
        %v932 = vunpack.c.l.b16 %v896
        %v933 = vunpack.c.l.b16 %v897
        %v934 = vunpack.c.l.b16 %v898
        %v935 = vunpack.c.l.b16 %v899
        %v936 = vunpack.c.l.b16 %v900
        %v937 = vunpack.c.l.b16 %v901
        %v938 = vunpack.c.l.b16 %v902
        %v939 = vunpack.c.l.b16 %v903
        %v940 = vunpack.c.l.b16 %v904
        %v941 = vunpack.c.l.b16 %v905
        %v942 = vunpack.c.l.b16 %v906
        %v943 = vunpack.c.l.b16 %v907
        %v944 = vunpack.c.l.b16 %v908
        %v945 = vpack.c.b16 %v930, %v929
        %v946 = vpack.c.b16 %v932, %v931
        %v947 = vpack.c.b16 %v934, %v933
        %v948 = vpack.c.b16 %v936, %v935
        %v949 = vpack.c.b16 %v938, %v937
        %v950 = vpack.c.b16 %v940, %v939
        %v951 = vpack.c.b16 %v942, %v941
        %v952 = vpack.c.b16 %v944, %v943
        %961 = vmatprep.subr.bf16.mxu0 0
        %962 = vmatpush1.bf16.msra.mxu0 %v952
        %963 = vmatprep.subr.bf16.mxu0 0
        %964 = vmatpush1.bf16.msra.mxu0 %v951
        %965 = vmatprep.subr.bf16.mxu0 0
        %966 = vmatpush1.bf16.msra.mxu0 %v950
        %967 = vmatprep.subr.bf16.mxu0 0
        %968 = vmatpush1.bf16.msra.mxu0 %v949
        %969 = vmatprep.subr.bf16.mxu0 0
        %970 = vmatpush1.bf16.msra.mxu0 %v948
        %971 = vmatprep.subr.bf16.mxu0 0
        %972 = vmatpush1.bf16.msra.mxu0 %v947
        %973 = vmatprep.subr.bf16.mxu0 0
        %974 = vmatpush1.bf16.msra.mxu0 %v946
        %975 = vmatprep.subr.bf16.mxu0 0
        %976 = vmatpush1.bf16.msra.mxu0 %v945
        %977 = vmatprep.subr.bf16.mxu0 0
        %978 = vmatpush2.bf16.msra.mxu0 0
        %979 = vmatprep.subr.bf16.mxu0 0
        %980 = vmatpush2.bf16.msra.mxu0 0
        %981 = vmatprep.subr.bf16.mxu0 0
        %982 = vmatpush2.bf16.msra.mxu0 0
        %983 = vmatprep.subr.bf16.mxu0 0
        %984 = vmatpush2.bf16.msra.mxu0 0
        %985 = vmatprep.subr.bf16.mxu0 0
        %986 = vmatpush2.bf16.msra.mxu0 0
        %987 = vmatprep.subr.bf16.mxu0 0
        %988 = vmatpush2.bf16.msra.mxu0 0
        %989 = vmatprep.subr.bf16.mxu0 0
        %990 = vmatpush2.bf16.msra.mxu0 0
        %991 = vmatprep.subr.bf16.mxu0 0
        %992 = vmatpush2.bf16.msra.mxu0 0
        %993 = vmatprep.mubr.bf16.mxu0 0
        %994 = vmatmul.mubr.bf16.gmra.mxu0 %v892
        %v995 = vpop.f32.mrf.mxu0
        %v996 = vadd.f32 %v912, %v995
        %v997 = vpop.f32.mrf.mxu0
        %v998 = vpop.f32.mrf.mxu0
        %v999 = vpop.f32.mrf.mxu0
        %1000 = vdwg.mxu0
        %v1001 = vadd.f32 %v502, %v996
        %1002 = vadd.xlane.f32.xlu0 %v1001
        %v1003 = vpop.xlane.xlu0 %1002
        %v1004 = vmul.f32 %v1003, 0.03125
        %v1005 = vsub.f32 %v1001, %v1004
        %v1006 = vmul.f32 %v1005, %v1005
        %1007 = vadd.xlane.f32.xlu0 %v1006
        %v1008 = vpop.xlane.xlu0 %1007
        %v1009 = vmul.f32 %v1004, 96.0
        %v1010 = vmul.f32 %v1009, %v1004
        %v1011 = vsub.f32 %v1008, %v1010
        %v1012 = vmul.f32 %v1011, 0.03125
        %v1013 = vmax.f32 %v1012, 0.0
        %v1014 = vadd.f32 %v1013, 1e-05
        %v1015 = vrsqrt.pop %v1014
        %v1016 = vmul.f32 %v1005, %v1015
        %v1017 = vlaneseq
        %v1018 = vshrl.u32 %v1017, 7
        %v1019 = vsub.s32 2, %v1018
        %v1020 = vrot.slane %v501, %v1019
        %v1021 = vmul.f32 %v1016, %v1020
        %v1022 = vlaneseq
        %v1023 = vshrl.u32 %v1022, 7
        %v1024 = vsub.s32 3, %v1023
        %v1025 = vrot.slane %v501, %v1024
        %v1026 = vadd.f32 %v1021, %v1025
        %v1027 = vpack.c.bf16 %v1026, %v1026
        %v1028 = vld [vmem:[#allocation11] sm:$0xf]
        %v1029 = vld [vmem:[#allocation11 + $0x4] sm:$0xf]
        %v1030 = vld [vmem:[#allocation11 + $0x8] sm:$0xf]
        %v1031 = vld [vmem:[#allocation11 + $0xc] sm:$0xf]
        %v1032 = vld [vmem:[#allocation11 + $0x10] sm:$0xf]
        %v1033 = vld [vmem:[#allocation11 + $0x14] sm:$0xf]
        %v1034 = vld [vmem:[#allocation11 + $0x18] sm:$0xf]
        %v1035 = vld [vmem:[#allocation11 + $0x1c] sm:$0xf]
        %v1036 = vld [vmem:[#allocation11 + $0x20] sm:$0xf]
        %v1037 = vld [vmem:[#allocation11 + $0x24] sm:$0xf]
        %v1038 = vld [vmem:[#allocation11 + $0x28] sm:$0xf]
        %v1039 = vld [vmem:[#allocation11 + $0x2c] sm:$0xf]
        %v1040 = vld [vmem:[#allocation11 + $0x30] sm:$0xf]
        %v1041 = vld [vmem:[#allocation11 + $0x34] sm:$0xf]
        %v1042 = vld [vmem:[#allocation11 + $0x38] sm:$0xf]
        %v1043 = vld [vmem:[#allocation11 + $0x3c] sm:$0xf]
        %v1044 = vld [vmem:[%s7] sm:$0x1]
        %v1046 = vlaneseq
        %v1047 = vshrl.u32 %v1046, 7
        %v1048 = vsub.s32 0, %v1047
        %v1049 = vrot.slane %v1044, %v1048
        %v1067 = vunpack.c.l.b16 %v1028
        %v1068 = vunpack.c.l.b16 %v1029
        %v1069 = vunpack.c.l.b16 %v1030
        %v1070 = vunpack.c.l.b16 %v1031
        %v1071 = vunpack.c.l.b16 %v1032
        %v1072 = vunpack.c.l.b16 %v1033
        %v1073 = vunpack.c.l.b16 %v1034
        %v1074 = vunpack.c.l.b16 %v1035
        %v1075 = vunpack.c.l.b16 %v1036
        %v1076 = vunpack.c.l.b16 %v1037
        %v1077 = vunpack.c.l.b16 %v1038
        %v1078 = vunpack.c.l.b16 %v1039
        %v1079 = vunpack.c.l.b16 %v1040
        %v1080 = vunpack.c.l.b16 %v1041
        %v1081 = vunpack.c.l.b16 %v1042
        %v1082 = vunpack.c.l.b16 %v1043
        %v1083 = vpack.c.b16 %v1068, %v1067
        %v1084 = vpack.c.b16 %v1070, %v1069
        %v1085 = vpack.c.b16 %v1072, %v1071
        %v1086 = vpack.c.b16 %v1074, %v1073
        %v1087 = vpack.c.b16 %v1076, %v1075
        %v1088 = vpack.c.b16 %v1078, %v1077
        %v1089 = vpack.c.b16 %v1080, %v1079
        %v1090 = vpack.c.b16 %v1082, %v1081
        %1099 = vmatprep.subr.bf16.mxu0 0
        %1100 = vmatpush1.bf16.msra.mxu0 %v1090
        %1101 = vmatprep.subr.bf16.mxu0 0
        %1102 = vmatpush1.bf16.msra.mxu0 %v1089
        %1103 = vmatprep.subr.bf16.mxu0 0
        %1104 = vmatpush1.bf16.msra.mxu0 %v1088
        %1105 = vmatprep.subr.bf16.mxu0 0
        %1106 = vmatpush1.bf16.msra.mxu0 %v1087
        %1107 = vmatprep.subr.bf16.mxu0 0
        %1108 = vmatpush1.bf16.msra.mxu0 %v1086
        %1109 = vmatprep.subr.bf16.mxu0 0
        %1110 = vmatpush1.bf16.msra.mxu0 %v1085
        %1111 = vmatprep.subr.bf16.mxu0 0
        %1112 = vmatpush1.bf16.msra.mxu0 %v1084
        %1113 = vmatprep.subr.bf16.mxu0 0
        %1114 = vmatpush1.bf16.msra.mxu0 %v1083
        %1115 = vmatprep.subr.bf16.mxu0 0
        %1116 = vmatpush2.bf16.msra.mxu0 0
        %1117 = vmatprep.subr.bf16.mxu0 0
        %1118 = vmatpush2.bf16.msra.mxu0 0
        %1119 = vmatprep.subr.bf16.mxu0 0
        %1120 = vmatpush2.bf16.msra.mxu0 0
        %1121 = vmatprep.subr.bf16.mxu0 0
        %1122 = vmatpush2.bf16.msra.mxu0 0
        %1123 = vmatprep.subr.bf16.mxu0 0
        %1124 = vmatpush2.bf16.msra.mxu0 0
        %1125 = vmatprep.subr.bf16.mxu0 0
        %1126 = vmatpush2.bf16.msra.mxu0 0
        %1127 = vmatprep.subr.bf16.mxu0 0
        %1128 = vmatpush2.bf16.msra.mxu0 0
        %1129 = vmatprep.subr.bf16.mxu0 0
        %1130 = vmatpush2.bf16.msra.mxu0 0
        %1131 = vmatprep.mubr.bf16.mxu0 0
        %1132 = vmatmul.mubr.bf16.gmra.mxu0 %v1027
        %v1133 = vpop.f32.mrf.mxu0
        %v1134 = vadd.f32 %v1049, %v1133
        %v1135 = vpop.f32.mrf.mxu0
        %v1136 = vpop.f32.mrf.mxu0
        %v1137 = vpop.f32.mrf.mxu0
        %1138 = vdwg.mxu0
        %v1139 = vmul.f32 %v1134, 0.5
        %v1140 = vmul.f32 %v1134, 0.70710677
        %v1141 = verf.f32.pop %v1140
        %v1142 = vadd.f32 %v1141, 1.0
        %v1143 = vmul.f32 %v1139, %v1142
        %v1144 = vpack.c.bf16 %v1143, %v1143
        %v1145 = vld [vmem:[#allocation13] sm:$0xf]
        %v1146 = vld [vmem:[#allocation13 + $0x4] sm:$0xf]
        %v1147 = vld [vmem:[#allocation13 + $0x8] sm:$0xf]
        %v1148 = vld [vmem:[#allocation13 + $0xc] sm:$0xf]
        %v1149 = vld [vmem:[#allocation13 + $0x10] sm:$0xf]
        %v1150 = vld [vmem:[#allocation13 + $0x14] sm:$0xf]
        %v1151 = vld [vmem:[#allocation13 + $0x18] sm:$0xf]
        %v1152 = vld [vmem:[#allocation13 + $0x1c] sm:$0xf]
        %v1153 = vld [vmem:[#allocation13 + $0x20] sm:$0xf]
        %v1154 = vld [vmem:[#allocation13 + $0x24] sm:$0xf]
        %v1155 = vld [vmem:[#allocation13 + $0x28] sm:$0xf]
        %v1156 = vld [vmem:[#allocation13 + $0x2c] sm:$0xf]
        %v1157 = vld [vmem:[#allocation13 + $0x30] sm:$0xf]
        %v1158 = vld [vmem:[#allocation13 + $0x34] sm:$0xf]
        %v1159 = vld [vmem:[#allocation13 + $0x38] sm:$0xf]
        %v1160 = vld [vmem:[#allocation13 + $0x3c] sm:$0xf]
        %v1177 = vunpack.c.l.b16 %v1145
        %v1178 = vunpack.c.l.b16 %v1146
        %v1179 = vunpack.c.l.b16 %v1147
        %v1180 = vunpack.c.l.b16 %v1148
        %v1181 = vunpack.c.l.b16 %v1149
        %v1182 = vunpack.c.l.b16 %v1150
        %v1183 = vunpack.c.l.b16 %v1151
        %v1184 = vunpack.c.l.b16 %v1152
        %v1185 = vunpack.c.l.b16 %v1153
        %v1186 = vunpack.c.l.b16 %v1154
        %v1187 = vunpack.c.l.b16 %v1155
        %v1188 = vunpack.c.l.b16 %v1156
        %v1189 = vunpack.c.l.b16 %v1157
        %v1190 = vunpack.c.l.b16 %v1158
        %v1191 = vunpack.c.l.b16 %v1159
        %v1192 = vunpack.c.l.b16 %v1160
        %v1193 = vpack.c.b16 %v1178, %v1177
        %v1194 = vpack.c.b16 %v1180, %v1179
        %v1195 = vpack.c.b16 %v1182, %v1181
        %v1196 = vpack.c.b16 %v1184, %v1183
        %v1197 = vpack.c.b16 %v1186, %v1185
        %v1198 = vpack.c.b16 %v1188, %v1187
        %v1199 = vpack.c.b16 %v1190, %v1189
        %v1200 = vpack.c.b16 %v1192, %v1191
        %1209 = vmatprep.subr.bf16.mxu0 0
        %1210 = vmatpush1.bf16.msra.mxu0 %v1200
        %1211 = vmatprep.subr.bf16.mxu0 0
        %1212 = vmatpush1.bf16.msra.mxu0 %v1199
        %1213 = vmatprep.subr.bf16.mxu0 0
        %1214 = vmatpush1.bf16.msra.mxu0 %v1198
        %1215 = vmatprep.subr.bf16.mxu0 0
        %1216 = vmatpush1.bf16.msra.mxu0 %v1197
        %1217 = vmatprep.subr.bf16.mxu0 0
        %1218 = vmatpush1.bf16.msra.mxu0 %v1196
        %1219 = vmatprep.subr.bf16.mxu0 0
        %1220 = vmatpush1.bf16.msra.mxu0 %v1195
        %1221 = vmatprep.subr.bf16.mxu0 0
        %1222 = vmatpush1.bf16.msra.mxu0 %v1194
        %1223 = vmatprep.subr.bf16.mxu0 0
        %1224 = vmatpush1.bf16.msra.mxu0 %v1193
        %1225 = vmatprep.subr.bf16.mxu0 0
        %1226 = vmatpush2.bf16.msra.mxu0 0
        %1227 = vmatprep.subr.bf16.mxu0 0
        %1228 = vmatpush2.bf16.msra.mxu0 0
        %1229 = vmatprep.subr.bf16.mxu0 0
        %1230 = vmatpush2.bf16.msra.mxu0 0
        %1231 = vmatprep.subr.bf16.mxu0 0
        %1232 = vmatpush2.bf16.msra.mxu0 0
        %1233 = vmatprep.subr.bf16.mxu0 0
        %1234 = vmatpush2.bf16.msra.mxu0 0
        %1235 = vmatprep.subr.bf16.mxu0 0
        %1236 = vmatpush2.bf16.msra.mxu0 0
        %1237 = vmatprep.subr.bf16.mxu0 0
        %1238 = vmatpush2.bf16.msra.mxu0 0
        %1239 = vmatprep.subr.bf16.mxu0 0
        %1240 = vmatpush2.bf16.msra.mxu0 0
        %1241 = vmatprep.mubr.bf16.mxu0 0
        %1242 = vmatmul.mubr.bf16.gmra.mxu0 %v1144
        %v1243 = vpop.f32.mrf.mxu0
        %v1244 = vadd.f32 0.0, %v1243
        %v1245 = vpop.f32.mrf.mxu0
        %v1246 = vpop.f32.mrf.mxu0
        %v1247 = vpop.f32.mrf.mxu0
        %1248 = vdwg.mxu0
        %v1249 = vadd.f32 %v1001, %v1244
        %v1250 = vlaneseq
        %v1251 = vshrl.u32 %v1250, 7
        %v1252 = vsub.s32 7, %v1251
        %v1253 = vrot.slane %v501, %v1252
        %v1254 = vadd.f32 %v1249, %v1253
        %1255 = vadd.xlane.f32.xlu0 %v1254
        %v1256 = vpop.xlane.xlu0 %1255
        %v1257 = vmul.f32 %v1256, 0.03125
        %v1258 = vsub.f32 %v1254, %v1257
        %v1259 = vmul.f32 %v1258, %v1258
        %1260 = vadd.xlane.f32.xlu0 %v1259
        %v1261 = vpop.xlane.xlu0 %1260
        %v1262 = vmul.f32 %v1257, 96.0
        %v1263 = vmul.f32 %v1262, %v1257
        %v1264 = vsub.f32 %v1261, %v1263
        %v1265 = vmul.f32 %v1264, 0.03125
        %v1266 = vmax.f32 %v1265, 0.0
        %v1267 = vadd.f32 %v1266, 1e-05
        %v1268 = vrsqrt.pop %v1267
        %v1269 = vmul.f32 %v1258, %v1268
        %v1270 = vlaneseq
        %v1271 = vshrl.u32 %v1270, 7
        %v1272 = vsub.s32 4, %v1271
        %v1273 = vrot.slane %v501, %v1272
        %v1274 = vmul.f32 %v1269, %v1273
        %v1275 = vlaneseq
        %v1276 = vshrl.u32 %v1275, 7
        %v1277 = vsub.s32 5, %v1276
        %v1278 = vrot.slane %v501, %v1277
        %v1279 = vadd.f32 %v1274, %v1278
        %v1280 = vpack.c.bf16 %v1279, %v1279
        %v1281 = vld [vmem:[#allocation14] sm:$0xf]
        %v1282 = vld [vmem:[#allocation14 + $0x4] sm:$0xf]
        %v1283 = vld [vmem:[#allocation14 + $0x8] sm:$0xf]
        %v1284 = vld [vmem:[#allocation14 + $0xc] sm:$0xf]
        %v1285 = vld [vmem:[#allocation14 + $0x10] sm:$0xf]
        %v1286 = vld [vmem:[#allocation14 + $0x14] sm:$0xf]
        %v1287 = vld [vmem:[#allocation14 + $0x18] sm:$0xf]
        %v1288 = vld [vmem:[#allocation14 + $0x1c] sm:$0xf]
        %v1289 = vld [vmem:[#allocation14 + $0x20] sm:$0xf]
        %v1290 = vld [vmem:[#allocation14 + $0x24] sm:$0xf]
        %v1291 = vld [vmem:[#allocation14 + $0x28] sm:$0xf]
        %v1292 = vld [vmem:[#allocation14 + $0x2c] sm:$0xf]
        %v1293 = vld [vmem:[#allocation14 + $0x30] sm:$0xf]
        %v1294 = vld [vmem:[#allocation14 + $0x34] sm:$0xf]
        %v1295 = vld [vmem:[#allocation14 + $0x38] sm:$0xf]
        %v1296 = vld [vmem:[#allocation14 + $0x3c] sm:$0xf]
        %v1297 = vld [vmem:[%s10] sm:$0x1]
        %v1299 = vlaneseq
        %v1300 = vshrl.u32 %v1299, 7
        %v1301 = vsub.s32 0, %v1300
        %v1302 = vrot.slane %v1297, %v1301
        %v1320 = vunpack.c.l.b16 %v1281
        %v1321 = vunpack.c.l.b16 %v1282
        %v1322 = vunpack.c.l.b16 %v1283
        %v1323 = vunpack.c.l.b16 %v1284
        %v1324 = vunpack.c.l.b16 %v1285
        %v1325 = vunpack.c.l.b16 %v1286
        %v1326 = vunpack.c.l.b16 %v1287
        %v1327 = vunpack.c.l.b16 %v1288
        %v1328 = vunpack.c.l.b16 %v1289
        %v1329 = vunpack.c.l.b16 %v1290
        %v1330 = vunpack.c.l.b16 %v1291
        %v1331 = vunpack.c.l.b16 %v1292
        %v1332 = vunpack.c.l.b16 %v1293
        %v1333 = vunpack.c.l.b16 %v1294
        %v1334 = vunpack.c.l.b16 %v1295
        %v1335 = vunpack.c.l.b16 %v1296
        %v1336 = vpack.c.b16 %v1321, %v1320
        %v1337 = vpack.c.b16 %v1323, %v1322
        %v1338 = vpack.c.b16 %v1325, %v1324
        %v1339 = vpack.c.b16 %v1327, %v1326
        %v1340 = vpack.c.b16 %v1329, %v1328
        %v1341 = vpack.c.b16 %v1331, %v1330
        %v1342 = vpack.c.b16 %v1333, %v1332
        %v1343 = vpack.c.b16 %v1335, %v1334
        %1352 = vmatprep.subr.bf16.mxu0 0
        %1353 = vmatpush1.bf16.msra.mxu0 %v1343
        %1354 = vmatprep.subr.bf16.mxu0 0
        %1355 = vmatpush1.bf16.msra.mxu0 %v1342
        %1356 = vmatprep.subr.bf16.mxu0 0
        %1357 = vmatpush1.bf16.msra.mxu0 %v1341
        %1358 = vmatprep.subr.bf16.mxu0 0
        %1359 = vmatpush1.bf16.msra.mxu0 %v1340
        %1360 = vmatprep.subr.bf16.mxu0 0
        %1361 = vmatpush1.bf16.msra.mxu0 %v1339
        %1362 = vmatprep.subr.bf16.mxu0 0
        %1363 = vmatpush1.bf16.msra.mxu0 %v1338
        %1364 = vmatprep.subr.bf16.mxu0 0
        %1365 = vmatpush1.bf16.msra.mxu0 %v1337
        %1366 = vmatprep.subr.bf16.mxu0 0
        %1367 = vmatpush1.bf16.msra.mxu0 %v1336
        %1368 = vmatprep.subr.bf16.mxu0 0
        %1369 = vmatpush2.bf16.msra.mxu0 0
        %1370 = vmatprep.subr.bf16.mxu0 0
        %1371 = vmatpush2.bf16.msra.mxu0 0
        %1372 = vmatprep.subr.bf16.mxu0 0
        %1373 = vmatpush2.bf16.msra.mxu0 0
        %1374 = vmatprep.subr.bf16.mxu0 0
        %1375 = vmatpush2.bf16.msra.mxu0 0
        %1376 = vmatprep.subr.bf16.mxu0 0
        %1377 = vmatpush2.bf16.msra.mxu0 0
        %1378 = vmatprep.subr.bf16.mxu0 0
        %1379 = vmatpush2.bf16.msra.mxu0 0
        %1380 = vmatprep.subr.bf16.mxu0 0
        %1381 = vmatpush2.bf16.msra.mxu0 0
        %1382 = vmatprep.subr.bf16.mxu0 0
        %1383 = vmatpush2.bf16.msra.mxu0 0
        %1384 = vmatprep.mubr.bf16.mxu0 0
        %1385 = vmatmul.mubr.bf16.gmra.mxu0 %v1280
        %v1386 = vpop.f32.mrf.mxu0
        %v1387 = vadd.f32 %v1302, %v1386
        %v1388 = vpop.f32.mrf.mxu0
        %v1389 = vpop.f32.mrf.mxu0
        %v1390 = vpop.f32.mrf.mxu0
        %1391 = vdwg.mxu0
        %1392 = vst [vmem:[%s499] sm:$0xff] %v1387
        %s1393 = sand.u32 %s276, 1
        %s1394 = scalar_lea.sflag [#allocation4], %s1393
        %s1395 = sand.u32 %s276, 1
        %s1396 = smul.addr %s1395, 8
        %s1397 = scalar_lea.vmem [#allocation16], %s1396
        // Predicated region
        $region97: #{tpu_custom_call.1} parent=63 // pred_check
          %p1398 = pneg %p286
        $region98: #{tpu_custom_call.1} parent=63 // pred_check_branch
          %1400 = sbr.rel (%p1398) target = $region100
        $region99: #{tpu_custom_call.1} parent=63 // pred_region
          %s1402 = ssub.s32 128, 128
          %1403 = vsyncadd %s1394, %s1402
          %s1404 = smul.addr %s32, 128
          %s1405 = scalar_lea.hbm %s11, %s1404
          %s1407 = sshll.u32 %s1397, 4
          %s1408 = int_to_ptr.vmem [resolvable:$true] %s1407
          %1410 = dma.vmem_to_hbm [thread:$0]  %s1408, 128, %s1405, %s1394
        $region100: #{tpu_custom_call.1} parent=63 // pred_fallthru
          _
      $region64: #{tpu_custom_call.1} parent=5 // pred_fallthru
        _
      %p1411 = scmp.le.s32.totalorder 2, %s27
      // Predicated region
      $region101: #{tpu_custom_call.1} parent=5 // pred_check
        %p1412 = pneg %p1411
      $region102: #{tpu_custom_call.1} parent=5 // pred_check_branch
        %1414 = sbr.rel (%p1412) target = $region104
      $region103: #{tpu_custom_call.1} parent=5 // pred_region
        %s1415 = ssub.s32 %s27, 2
        // Predicated region
        $region105: #{tpu_custom_call.1} parent=103 // pred_check
          %p1416 = pneg %p292
        $region106: #{tpu_custom_call.1} parent=103 // pred_check_branch
          %1418 = sbr.rel (%p1416) target = $region108
        $region107: #{tpu_custom_call.1} parent=103 // pred_region
          %s1419 = sand.u32 %s277, 1
          %s1420 = scalar_lea.sflag [#allocation4], %s1419
          %s1421 = sand.u32 %s277, 1
          %s1422 = smul.addr %s1421, 8
          %s1423 = scalar_lea.vmem [#allocation16], %s1422
          %1424 = dma.done %s1420, 128
        $region108: #{tpu_custom_call.1} parent=103 // pred_fallthru
          _
      $region104: #{tpu_custom_call.1} parent=5 // pred_fallthru
        _
    $region6: #{tpu_custom_call.1} parent=1 // loop_footer
      %s31 = sadd.s32 1, %s27
    $region7: #{tpu_custom_call.1} parent=1 // loop_footer_branch
      %26 = sbr.rel target = $region3
    $region8: #{tpu_custom_call.1} parent=1 // loop_exit
      _
    %1425 = vsyncpa [#allocation3], 1
    %s1426 = scalar_lea.sflag [#allocation3], 1
    %1427 = vsyncpa %s1426, 1
    %1428 = vsyncpa [#allocation6], 1
    %1429 = vsyncpa [#allocation9], 1
    %1430 = vsyncpa [#allocation12], 1
    %1431 = vsyncpa [#allocation15], 1
    %1432 = vsyncpa [#allocation4], 1
    %s1433 = scalar_lea.sflag [#allocation4], 1
    %1434 = vsyncpa %s1433, 1

</llo_original>
